<compile_context>
chip_gen: v7x
topology: tpu7x:2x2x1
jax: 0.10.0
libtpu: 0.0.40
codegen_flags: <defaults>
</compile_context>

<pallas_src>
import functools
import math

import jax
import jax.numpy as jnp
from jax.experimental import pallas as pl
from jax.experimental.pallas import tpu as pltpu

LANES = 128


def _round_up(x, m):
    return (x + m - 1) // m * m


# ----------------------------------------------------------------------------
# Pallas kernel 1: fused  out = act(x @ w + b)   (M-tiled, weights resident)
# ----------------------------------------------------------------------------
def _matmul_bias_act_kernel(x_ref, w_ref, b_ref, o_ref, *, relu):
    acc = jnp.dot(x_ref[...], w_ref[...], preferred_element_type=jnp.float32)
    acc = acc + b_ref[...]                       # b_ref is (1, N), broadcasts
    if relu:
        acc = jnp.maximum(acc, 0.0)
    o_ref[...] = acc.astype(o_ref.dtype)


def matmul_bias_act(x, w, b, *, relu=True, out_dtype=jnp.bfloat16, tm=256):
    """x: [M, K] bf16, w: [K, N] bf16 (N % 128 == 0), b: [1, N] f32."""
    M, K = x.shape
    K2, N = w.shape
    assert K == K2 and N % LANES == 0 and b.shape == (1, N)

    TM = min(tm, _round_up(M, 8))                # sublane-aligned tile
    Mpad = _round_up(M, TM)
    if Mpad != M:
        x = jnp.pad(x, ((0, Mpad - M), (0, 0)))

    out_isz = jnp.dtype(out_dtype).itemsize
    cost = pl.CostEstimate(
        flops=2 * Mpad * K * N,
        transcendentals=0,
        bytes_accessed=(Mpad * K * x.dtype.itemsize + K * N * w.dtype.itemsize
                        + N * 4 + Mpad * N * out_isz),
    )

    out = pl.pallas_call(
        functools.partial(_matmul_bias_act_kernel, relu=relu),
        out_shape=jax.ShapeDtypeStruct((Mpad, N), out_dtype),
        grid_spec=pltpu.PrefetchScalarGridSpec(
            num_scalar_prefetch=0,
            grid=(Mpad // TM,),
            in_specs=[
                pl.BlockSpec((TM, K), lambda i: (i, 0)),   # x tile (pipelined)
                pl.BlockSpec((K, N), lambda i: (0, 0)),    # weights resident
                pl.BlockSpec((1, N), lambda i: (0, 0)),    # bias resident
            ],
            out_specs=pl.BlockSpec((TM, N), lambda i: (i, 0)),
        ),
        compiler_params=pltpu.CompilerParams(
            dimension_semantics=("parallel",)),            # v7x: 2 TCs
        cost_estimate=cost,
    )(x, w, b)
    return out if Mpad == M else out[:M]


# ----------------------------------------------------------------------------
# Pallas kernel 2: fused fc1(+ReLU) + fc2 (hidden activation never hits HBM)
# ----------------------------------------------------------------------------
def _fused_fc_kernel(x_ref, w1_ref, b1_ref, w2_ref, b2_ref, o_ref):
    h = jnp.dot(x_ref[...], w1_ref[...], preferred_element_type=jnp.float32)
    h = jnp.maximum(h + b1_ref[...], 0.0).astype(w2_ref.dtype)
    q = jnp.dot(h, w2_ref[...], preferred_element_type=jnp.float32)
    o_ref[...] = (q + b2_ref[...]).astype(o_ref.dtype)


def fused_fc(x, w1, b1, w2, b2, *, tm=256):
    """x: [M, K] bf16, w1: [K, H] bf16, w2: [H, N] bf16 (N % 128 == 0)."""
    M, K = x.shape
    K1, H = w1.shape
    H2, N = w2.shape
    assert K == K1 and H == H2 and N % LANES == 0

    TM = min(tm, _round_up(M, 8))
    Mpad = _round_up(M, TM)
    if Mpad != M:
        x = jnp.pad(x, ((0, Mpad - M), (0, 0)))

    cost = pl.CostEstimate(
        flops=2 * Mpad * K * H + 2 * Mpad * H * N,
        transcendentals=0,
        bytes_accessed=(Mpad * K * x.dtype.itemsize + K * H * 2 + H * 4
                        + H * N * 2 + N * 4 + Mpad * N * 4),
    )

    out = pl.pallas_call(
        _fused_fc_kernel,
        out_shape=jax.ShapeDtypeStruct((Mpad, N), jnp.float32),
        grid_spec=pltpu.PrefetchScalarGridSpec(
            num_scalar_prefetch=0,
            grid=(Mpad // TM,),
            in_specs=[
                pl.BlockSpec((TM, K), lambda i: (i, 0)),
                pl.BlockSpec((K, H), lambda i: (0, 0)),
                pl.BlockSpec((1, H), lambda i: (0, 0)),
                pl.BlockSpec((H, N), lambda i: (0, 0)),
                pl.BlockSpec((1, N), lambda i: (0, 0)),
            ],
            out_specs=pl.BlockSpec((TM, N), lambda i: (i, 0)),
        ),
        compiler_params=pltpu.CompilerParams(
            dimension_semantics=("parallel",)),
        cost_estimate=cost,
    )(x, w1, b1, w2, b2)
    return out if Mpad == M else out[:M]


# ----------------------------------------------------------------------------
# Conv via im2col (XLA glue, bf16) + Pallas matmul (hot path)
# ----------------------------------------------------------------------------
def _im2col(x_nhwc, kh, kw, stride):
    B, H, W, C = x_nhwc.shape
    oh = (H - kh) // stride + 1
    ow = (W - kw) // stride + 1
    patches = []
    for i in range(kh):
        for j in range(kw):
            patches.append(
                x_nhwc[:, i:i + stride * oh:stride, j:j + stride * ow:stride, :])
    p = jnp.stack(patches, axis=3)              # [B, OH, OW, KH*KW, C]
    return p.reshape(B * oh * ow, kh * kw * C), oh, ow


def conv2d_act(x_nhwc, w_mat, b_pad, oc, k, stride):
    B = x_nhwc.shape[0]
    cols, oh, ow = _im2col(x_nhwc, k, k, stride)
    out = matmul_bias_act(cols, w_mat, b_pad, relu=True, out_dtype=jnp.bfloat16)
    npad = w_mat.shape[1]
    out = out.reshape(B, oh, ow, npad)
    return out[..., :oc] if npad != oc else out


# ----------------------------------------------------------------------------
# Parameter init (kaiming_uniform_ with relu gain, bias = 0) + one-time prep
# ----------------------------------------------------------------------------
def _kaiming_uniform(key, shape, fan_in):
    bound = math.sqrt(2.0) * math.sqrt(3.0 / fan_in)    # gain * sqrt(3/fan_in)
    return jax.random.uniform(key, shape, jnp.float32, -bound, bound)


def _conv_out(s, k, st):
    return (s - (k - 1) - 1) // st + 1


def init_dqn_params(key, input_shape, num_actions):
    c, h, w = input_shape
    convw = _conv_out(_conv_out(_conv_out(w, 8, 4), 4, 2), 3, 1)
    convh = _conv_out(_conv_out(_conv_out(h, 8, 4), 4, 2), 3, 1)
    lin_in = convw * convh * 32
    ks = jax.random.split(key, 5)
    return {
        "conv1_w": _kaiming_uniform(ks[0], (16, c, 8, 8), c * 8 * 8),
        "conv1_b": jnp.zeros((16,), jnp.float32),
        "conv2_w": _kaiming_uniform(ks[1], (32, 16, 4, 4), 16 * 4 * 4),
        "conv2_b": jnp.zeros((32,), jnp.float32),
        "conv3_w": _kaiming_uniform(ks[2], (32, 32, 3, 3), 32 * 3 * 3),
        "conv3_b": jnp.zeros((32,), jnp.float32),
        "fc1_w": _kaiming_uniform(ks[3], (256, lin_in), lin_in),
        "fc1_b": jnp.zeros((256,), jnp.float32),
        "fc2_w": _kaiming_uniform(ks[4], (num_actions, 256), 256),
        "fc2_b": jnp.zeros((num_actions,), jnp.float32),
    }


def prepare_params(params, input_shape, num_actions):
    """One-time layout prep (outside the per-step forward):
      * conv weights -> [KH*KW*IC, 128] bf16 matmul matrices (lane-padded N),
      * fc weights pre-transposed to [K, N] bf16; fc2 N padded to 128 lanes,
      * fc1 rows permuted from NCHW-flatten to NHWC-flatten order so the
        forward needs no activation transpose before flattening.
    """
    c, h, w = input_shape
    convw = _conv_out(_conv_out(_conv_out(w, 8, 4), 4, 2), 3, 1)
    convh = _conv_out(_conv_out(_conv_out(h, 8, 4), 4, 2), 3, 1)

    def conv_prep(w_oihw, b):
        OC, IC, KH, KW = w_oihw.shape
        w_mat = jnp.transpose(w_oihw, (2, 3, 1, 0)).reshape(KH * KW * IC, OC)
        w_mat = jnp.pad(w_mat, ((0, 0), (0, LANES - OC))).astype(jnp.bfloat16)
        b_pad = jnp.pad(b, (0, LANES - OC)).reshape(1, LANES).astype(jnp.float32)
        return w_mat, b_pad

    c1w, c1b = conv_prep(params["conv1_w"], params["conv1_b"])
    c2w, c2b = conv_prep(params["conv2_w"], params["conv2_b"])
    c3w, c3b = conv_prep(params["conv3_w"], params["conv3_b"])

    # fc1: [256, 32*convh*convw] (c,h,w order) -> [convh*convw*32, 256] (h,w,c)
    fc1 = params["fc1_w"].reshape(256, 32, convh, convw)
    fc1 = jnp.transpose(fc1, (2, 3, 1, 0)).reshape(convh * convw * 32, 256)
    fc1 = fc1.astype(jnp.bfloat16)
    fc1_b = params["fc1_b"].reshape(1, 256).astype(jnp.float32)

    na_pad = _round_up(max(num_actions, 1), LANES)
    fc2 = jnp.pad(params["fc2_w"].T, ((0, 0), (0, na_pad - num_actions)))
    fc2 = fc2.astype(jnp.bfloat16)
    fc2_b = jnp.pad(params["fc2_b"], (0, na_pad - num_actions))
    fc2_b = fc2_b.reshape(1, na_pad).astype(jnp.float32)

    return {
        "conv1_w": c1w, "conv1_b": c1b,
        "conv2_w": c2w, "conv2_b": c2b,
        "conv3_w": c3w, "conv3_b": c3b,
        "fc1_w": fc1, "fc1_b": fc1_b,
        "fc2_w": fc2, "fc2_b": fc2_b,
    }


# ----------------------------------------------------------------------------
# Forward pass (matches PyTorch DQN.forward semantics; bf16 MXU, f32 accumulate)
# ----------------------------------------------------------------------------
def dqn_forward(prep, x_nchw, num_actions):
    x = jnp.transpose(x_nchw, (0, 2, 3, 1)).astype(jnp.bfloat16)   # NCHW->NHWC
    # TODO(synk): fuse the im2col patch gather into the Pallas kernel (resident
    # NHWC tile + kh*kw shifted-matmul accumulation) to cut conv HBM reads 4-9x.
    x = conv2d_act(x, prep["conv1_w"], prep["conv1_b"], 16, 8, 4)  # relu(conv1)
    x = conv2d_act(x, prep["conv2_w"], prep["conv2_b"], 32, 4, 2)  # relu(conv2)
    x = conv2d_act(x, prep["conv3_w"], prep["conv3_b"], 32, 3, 1)  # relu(conv3)
    B = x.shape[0]
    x = x.reshape(B, -1)        # NHWC flatten; fc1 rows already permuted to match
    q = fused_fc(x, prep["fc1_w"], prep["fc1_b"], prep["fc2_w"], prep["fc2_b"])
    return q[:, :num_actions]


# ----------------------------------------------------------------------------
# Pure-JAX f32 reference (correctness check only)
# ----------------------------------------------------------------------------
def dqn_reference(params, x_nchw):
    def conv(x, w, b, s):
        y = jax.lax.conv_general_dilated(
            x, w, (s, s), "VALID", dimension_numbers=("NCHW", "OIHW", "NCHW"))
        return y + b[None, :, None, None]

    x = jax.nn.relu(conv(x_nchw, params["conv1_w"], params["conv1_b"], 4))
    x = jax.nn.relu(conv(x, params["conv2_w"], params["conv2_b"], 2))
    x = jax.nn.relu(conv(x, params["conv3_w"], params["conv3_b"], 1))
    x = x.reshape(x.shape[0], -1)
    x = jax.nn.relu(x @ params["fc1_w"].T + params["fc1_b"])
    return x @ params["fc2_w"].T + params["fc2_b"]


if __name__ == "__main__":
    key = jax.random.PRNGKey(0)
    k_param, k_x = jax.random.split(key)

    input_shape = (4, 64, 64)     # (c, h, w) -> conv output 4x4x32 -> 512
    num_actions = 4
    batch = 2

    params = init_dqn_params(k_param, input_shape, num_actions)
    prep = prepare_params(params, input_shape, num_actions)
    x = jax.random.normal(k_x, (batch,) + input_shape, jnp.float32)

    fwd = jax.jit(dqn_forward, static_argnums=2)
    q = jax.block_until_ready(fwd(prep, x, num_actions))

    q_ref = dqn_reference(params, x)
    assert q.shape == (batch, num_actions), q.shape
    max_err = float(jnp.max(jnp.abs(q - q_ref)))
    assert jnp.allclose(q, q_ref, rtol=5e-2, atol=1e-1), (
        f"mismatch vs reference (max abs err {max_err})")

    print("KERNEL_OK")
</pallas_src>

<mosaic_0001>
module attributes {stable_mosaic.version = 11 : i64} {
  func.func @_matmul_bias_act_kernel(%arg0: i32, %arg1: memref<256x256xbf16, #tpu.memory_space<vmem>>, %arg2: memref<256x128xbf16, #tpu.memory_space<vmem>>, %arg3: memref<1x128xf32, #tpu.memory_space<vmem>>, %arg4: memref<256x128xbf16, #tpu.memory_space<vmem>>) attributes {dimension_semantics = [#tpu.dimension_semantics<parallel>], iteration_bounds = array<i64: 2>, scalar_prefetch = 0 : i64, scratch_operands = 0 : i64, tpu.core_type = #tpu.core_type<tc>, window_params = [{transform_indices = @transform_0, window_bounds = array<i64: 256, 256>}, {pipeline_mode = #tpu.pipeline_mode<synchronous>, transform_indices = @transform_1, window_bounds = array<i64: 256, 128>}, {pipeline_mode = #tpu.pipeline_mode<synchronous>, transform_indices = @transform_2, window_bounds = array<i64: 1, 128>}, {transform_indices = @transform_3, window_bounds = array<i64: 256, 128>}]} {
    %c0 = arith.constant 0 : index
    %c0_0 = arith.constant 0 : index
    %0 = vector.load %arg1[%c0, %c0_0] : memref<256x256xbf16, #tpu.memory_space<vmem>>, vector<256x256xbf16>
    %c0_1 = arith.constant 0 : index
    %c0_2 = arith.constant 0 : index
    %1 = vector.load %arg2[%c0_1, %c0_2] : memref<256x128xbf16, #tpu.memory_space<vmem>>, vector<256x128xbf16>
    %cst = arith.constant dense<0.000000e+00> : vector<256x128xf32>
    %2 = tpu.matmul %0, %1, %cst {dimension_numbers = #tpu.dot_dimension_numbers<[1], [0], [0], [1], [0, 0, 1, 1], [], []>} : vector<256x256xbf16>, vector<256x128xbf16>, vector<256x128xf32> -> vector<256x128xf32>
    %c0_3 = arith.constant 0 : index
    %c0_4 = arith.constant 0 : index
    %3 = vector.load %arg3[%c0_3, %c0_4] : memref<1x128xf32, #tpu.memory_space<vmem>>, vector<1x128xf32>
    %4 = vector.broadcast %3 : vector<1x128xf32> to vector<256x128xf32>
    %5 = arith.addf %2, %4 : vector<256x128xf32>
    %cst_5 = arith.constant 0.000000e+00 : f32
    %6 = vector.broadcast %cst_5 : f32 to vector<256x128xf32>
    %7 = arith.maximumf %5, %6 : vector<256x128xf32>
    %8 = arith.truncf %7 : vector<256x128xf32> to vector<256x128xbf16>
    %c0_6 = arith.constant 0 : index
    %c0_7 = arith.constant 0 : index
    %9 = vector.load %arg4[%c0_6, %c0_7] : memref<256x128xbf16, #tpu.memory_space<vmem>>, vector<256x128xbf16>
    tpu.vector_store %arg4[%c0_6, %c0_7], %8 {strides = array<i32>} : memref<256x128xbf16, #tpu.memory_space<vmem>>, vector<256x128xbf16>,
    return
  }
  func.func @transform_0(%arg0: i32) -> (i32, i32) {
    %c0_i32 = arith.constant 0 : i32
    %c0_i32_0 = arith.constant 0 : i32
    return %arg0, %c0_i32 : i32, i32
  }
  func.func @transform_1(%arg0: i32) -> (i32, i32) {
    %c0_i32 = arith.constant 0 : i32
    %c0_i32_0 = arith.constant 0 : i32
    %c0_i32_1 = arith.constant 0 : i32
    return %c0_i32, %c0_i32_0 : i32, i32
  }
  func.func @transform_2(%arg0: i32) -> (i32, i32) {
    %c0_i32 = arith.constant 0 : i32
    %c0_i32_0 = arith.constant 0 : i32
    %c0_i32_1 = arith.constant 0 : i32
    return %c0_i32, %c0_i32_0 : i32, i32
  }
  func.func @transform_3(%arg0: i32) -> (i32, i32) {
    %c0_i32 = arith.constant 0 : i32
    %c0_i32_0 = arith.constant 0 : i32
    return %arg0, %c0_i32 : i32, i32
  }
}

module attributes {stable_mosaic.version = 11 : i64} {
  func.func @_matmul_bias_act_kernel(%arg0: i32, %arg1: memref<72x256xbf16, #tpu.memory_space<vmem>>, %arg2: memref<256x128xbf16, #tpu.memory_space<vmem>>, %arg3: memref<1x128xf32, #tpu.memory_space<vmem>>, %arg4: memref<72x128xbf16, #tpu.memory_space<vmem>>) attributes {dimension_semantics = [#tpu.dimension_semantics<parallel>], iteration_bounds = array<i64: 1>, scalar_prefetch = 0 : i64, scratch_operands = 0 : i64, tpu.core_type = #tpu.core_type<tc>, window_params = [{transform_indices = @transform_0, window_bounds = array<i64: 72, 256>}, {pipeline_mode = #tpu.pipeline_mode<synchronous>, transform_indices = @transform_1, window_bounds = array<i64: 256, 128>}, {pipeline_mode = #tpu.pipeline_mode<synchronous>, transform_indices = @transform_2, window_bounds = array<i64: 1, 128>}, {transform_indices = @transform_3, window_bounds = array<i64: 72, 128>}]} {
    %c0 = arith.constant 0 : index
    %c0_0 = arith.constant 0 : index
    %0 = vector.load %arg1[%c0, %c0_0] : memref<72x256xbf16, #tpu.memory_space<vmem>>, vector<72x256xbf16>
    %c0_1 = arith.constant 0 : index
    %c0_2 = arith.constant 0 : index
    %1 = vector.load %arg2[%c0_1, %c0_2] : memref<256x128xbf16, #tpu.memory_space<vmem>>, vector<256x128xbf16>
    %cst = arith.constant dense<0.000000e+00> : vector<72x128xf32>
    %2 = tpu.matmul %0, %1, %cst {dimension_numbers = #tpu.dot_dimension_numbers<[1], [0], [0], [1], [0, 0, 1, 1], [], []>} : vector<72x256xbf16>, vector<256x128xbf16>, vector<72x128xf32> -> vector<72x128xf32>
    %c0_3 = arith.constant 0 : index
    %c0_4 = arith.constant 0 : index
    %3 = vector.load %arg3[%c0_3, %c0_4] : memref<1x128xf32, #tpu.memory_space<vmem>>, vector<1x128xf32>
    %4 = vector.broadcast %3 : vector<1x128xf32> to vector<72x128xf32>
    %5 = arith.addf %2, %4 : vector<72x128xf32>
    %cst_5 = arith.constant 0.000000e+00 : f32
    %6 = vector.broadcast %cst_5 : f32 to vector<72x128xf32>
    %7 = arith.maximumf %5, %6 : vector<72x128xf32>
    %8 = arith.truncf %7 : vector<72x128xf32> to vector<72x128xbf16>
    %c0_6 = arith.constant 0 : index
    %c0_7 = arith.constant 0 : index
    %9 = vector.load %arg4[%c0_6, %c0_7] : memref<72x128xbf16, #tpu.memory_space<vmem>>, vector<72x128xbf16>
    tpu.vector_store %arg4[%c0_6, %c0_7], %8 {strides = array<i32>} : memref<72x128xbf16, #tpu.memory_space<vmem>>, vector<72x128xbf16>,
    return
  }
  func.func @transform_0(%arg0: i32) -> (i32, i32) {
    %c0_i32 = arith.constant 0 : i32
    %c0_i32_0 = arith.constant 0 : i32
    return %arg0, %c0_i32 : i32, i32
  }
  func.func @transform_1(%arg0: i32) -> (i32, i32) {
    %c0_i32 = arith.constant 0 : i32
    %c0_i32_0 = arith.constant 0 : i32
    %c0_i32_1 = arith.constant 0 : i32
    return %c0_i32, %c0_i32_0 : i32, i32
  }
  func.func @transform_2(%arg0: i32) -> (i32, i32) {
    %c0_i32 = arith.constant 0 : i32
    %c0_i32_0 = arith.constant 0 : i32
    %c0_i32_1 = arith.constant 0 : i32
    return %c0_i32, %c0_i32_0 : i32, i32
  }
  func.func @transform_3(%arg0: i32) -> (i32, i32) {
    %c0_i32 = arith.constant 0 : i32
    %c0_i32_0 = arith.constant 0 : i32
    return %arg0, %c0_i32 : i32, i32
  }
}

module attributes {stable_mosaic.version = 11 : i64} {
  func.func @_matmul_bias_act_kernel(%arg0: i32, %arg1: memref<32x288xbf16, #tpu.memory_space<vmem>>, %arg2: memref<288x128xbf16, #tpu.memory_space<vmem>>, %arg3: memref<1x128xf32, #tpu.memory_space<vmem>>, %arg4: memref<32x128xbf16, #tpu.memory_space<vmem>>) attributes {dimension_semantics = [#tpu.dimension_semantics<parallel>], iteration_bounds = array<i64: 1>, scalar_prefetch = 0 : i64, scratch_operands = 0 : i64, tpu.core_type = #tpu.core_type<tc>, window_params = [{transform_indices = @transform_0, window_bounds = array<i64: 32, 288>}, {pipeline_mode = #tpu.pipeline_mode<synchronous>, transform_indices = @transform_1, window_bounds = array<i64: 288, 128>}, {pipeline_mode = #tpu.pipeline_mode<synchronous>, transform_indices = @transform_2, window_bounds = array<i64: 1, 128>}, {transform_indices = @transform_3, window_bounds = array<i64: 32, 128>}]} {
    %c0 = arith.constant 0 : index
    %c0_0 = arith.constant 0 : index
    %0 = vector.load %arg1[%c0, %c0_0] : memref<32x288xbf16, #tpu.memory_space<vmem>>, vector<32x288xbf16>
    %c0_1 = arith.constant 0 : index
    %c0_2 = arith.constant 0 : index
    %1 = vector.load %arg2[%c0_1, %c0_2] : memref<288x128xbf16, #tpu.memory_space<vmem>>, vector<288x128xbf16>
    %cst = arith.constant dense<0.000000e+00> : vector<32x128xf32>
    %2 = tpu.matmul %0, %1, %cst {dimension_numbers = #tpu.dot_dimension_numbers<[1], [0], [0], [1], [0, 0, 1, 1], [], []>} : vector<32x288xbf16>, vector<288x128xbf16>, vector<32x128xf32> -> vector<32x128xf32>
    %c0_3 = arith.constant 0 : index
    %c0_4 = arith.constant 0 : index
    %3 = vector.load %arg3[%c0_3, %c0_4] : memref<1x128xf32, #tpu.memory_space<vmem>>, vector<1x128xf32>
    %4 = vector.broadcast %3 : vector<1x128xf32> to vector<32x128xf32>
    %5 = arith.addf %2, %4 : vector<32x128xf32>
    %cst_5 = arith.constant 0.000000e+00 : f32
    %6 = vector.broadcast %cst_5 : f32 to vector<32x128xf32>
    %7 = arith.maximumf %5, %6 : vector<32x128xf32>
    %8 = arith.truncf %7 : vector<32x128xf32> to vector<32x128xbf16>
    %c0_6 = arith.constant 0 : index
    %c0_7 = arith.constant 0 : index
    %9 = vector.load %arg4[%c0_6, %c0_7] : memref<32x128xbf16, #tpu.memory_space<vmem>>, vector<32x128xbf16>
    tpu.vector_store %arg4[%c0_6, %c0_7], %8 {strides = array<i32>} : memref<32x128xbf16, #tpu.memory_space<vmem>>, vector<32x128xbf16>,
    return
  }
  func.func @transform_0(%arg0: i32) -> (i32, i32) {
    %c0_i32 = arith.constant 0 : i32
    %c0_i32_0 = arith.constant 0 : i32
    return %arg0, %c0_i32 : i32, i32
  }
  func.func @transform_1(%arg0: i32) -> (i32, i32) {
    %c0_i32 = arith.constant 0 : i32
    %c0_i32_0 = arith.constant 0 : i32
    %c0_i32_1 = arith.constant 0 : i32
    return %c0_i32, %c0_i32_0 : i32, i32
  }
  func.func @transform_2(%arg0: i32) -> (i32, i32) {
    %c0_i32 = arith.constant 0 : i32
    %c0_i32_0 = arith.constant 0 : i32
    %c0_i32_1 = arith.constant 0 : i32
    return %c0_i32, %c0_i32_0 : i32, i32
  }
  func.func @transform_3(%arg0: i32) -> (i32, i32) {
    %c0_i32 = arith.constant 0 : i32
    %c0_i32_0 = arith.constant 0 : i32
    return %arg0, %c0_i32 : i32, i32
  }
}

module attributes {stable_mosaic.version = 11 : i64} {
  func.func @_fused_fc_kernel(%arg0: i32, %arg1: memref<8x512xbf16, #tpu.memory_space<vmem>>, %arg2: memref<512x256xbf16, #tpu.memory_space<vmem>>, %arg3: memref<1x256xf32, #tpu.memory_space<vmem>>, %arg4: memref<256x128xbf16, #tpu.memory_space<vmem>>, %arg5: memref<1x128xf32, #tpu.memory_space<vmem>>, %arg6: memref<8x128xf32, #tpu.memory_space<vmem>>) attributes {dimension_semantics = [#tpu.dimension_semantics<parallel>], iteration_bounds = array<i64: 1>, scalar_prefetch = 0 : i64, scratch_operands = 0 : i64, tpu.core_type = #tpu.core_type<tc>, window_params = [{transform_indices = @transform_0, window_bounds = array<i64: 8, 512>}, {pipeline_mode = #tpu.pipeline_mode<synchronous>, transform_indices = @transform_1, window_bounds = array<i64: 512, 256>}, {pipeline_mode = #tpu.pipeline_mode<synchronous>, transform_indices = @transform_2, window_bounds = array<i64: 1, 256>}, {pipeline_mode = #tpu.pipeline_mode<synchronous>, transform_indices = @transform_3, window_bounds = array<i64: 256, 128>}, {pipeline_mode = #tpu.pipeline_mode<synchronous>, transform_indices = @transform_4, window_bounds = array<i64: 1, 128>}, {transform_indices = @transform_5, window_bounds = array<i64: 8, 128>}]} {
    %c0 = arith.constant 0 : index
    %c0_0 = arith.constant 0 : index
    %0 = vector.load %arg1[%c0, %c0_0] : memref<8x512xbf16, #tpu.memory_space<vmem>>, vector<8x512xbf16>
    %c0_1 = arith.constant 0 : index
    %c0_2 = arith.constant 0 : index
    %1 = vector.load %arg2[%c0_1, %c0_2] : memref<512x256xbf16, #tpu.memory_space<vmem>>, vector<512x256xbf16>
    %cst = arith.constant dense<0.000000e+00> : vector<8x256xf32>
    %2 = tpu.matmul %0, %1, %cst {dimension_numbers = #tpu.dot_dimension_numbers<[1], [0], [0], [1], [0, 0, 1, 1], [], []>} : vector<8x512xbf16>, vector<512x256xbf16>, vector<8x256xf32> -> vector<8x256xf32>
    %c0_3 = arith.constant 0 : index
    %c0_4 = arith.constant 0 : index
    %3 = vector.load %arg3[%c0_3, %c0_4] : memref<1x256xf32, #tpu.memory_space<vmem>>, vector<1x256xf32>
    %4 = vector.broadcast %3 : vector<1x256xf32> to vector<8x256xf32>
    %5 = arith.addf %2, %4 : vector<8x256xf32>
    %cst_5 = arith.constant 0.000000e+00 : f32
    %6 = vector.broadcast %cst_5 : f32 to vector<8x256xf32>
    %7 = arith.maximumf %5, %6 : vector<8x256xf32>
    %8 = arith.truncf %7 : vector<8x256xf32> to vector<8x256xbf16>
    %c0_6 = arith.constant 0 : index
    %c0_7 = arith.constant 0 : index
    %9 = vector.load %arg4[%c0_6, %c0_7] : memref<256x128xbf16, #tpu.memory_space<vmem>>, vector<256x128xbf16>
    %cst_8 = arith.constant dense<0.000000e+00> : vector<8x128xf32>
    %10 = tpu.matmul %8, %9, %cst_8 {dimension_numbers = #tpu.dot_dimension_numbers<[1], [0], [0], [1], [0, 0, 1, 1], [], []>} : vector<8x256xbf16>, vector<256x128xbf16>, vector<8x128xf32> -> vector<8x128xf32>
    %c0_9 = arith.constant 0 : index
    %c0_10 = arith.constant 0 : index
    %11 = vector.load %arg5[%c0_9, %c0_10] : memref<1x128xf32, #tpu.memory_space<vmem>>, vector<1x128xf32>
    %12 = vector.broadcast %11 : vector<1x128xf32> to vector<8x128xf32>
    %13 = arith.addf %10, %12 : vector<8x128xf32>
    %c0_11 = arith.constant 0 : index
    %c0_12 = arith.constant 0 : index
    %14 = vector.load %arg6[%c0_11, %c0_12] : memref<8x128xf32, #tpu.memory_space<vmem>>, vector<8x128xf32>
    tpu.vector_store %arg6[%c0_11, %c0_12], %13 {strides = array<i32>} : memref<8x128xf32, #tpu.memory_space<vmem>>, vector<8x128xf32>,
    return
  }
  func.func @transform_0(%arg0: i32) -> (i32, i32) {
    %c0_i32 = arith.constant 0 : i32
    %c0_i32_0 = arith.constant 0 : i32
    return %arg0, %c0_i32 : i32, i32
  }
  func.func @transform_1(%arg0: i32) -> (i32, i32) {
    %c0_i32 = arith.constant 0 : i32
    %c0_i32_0 = arith.constant 0 : i32
    %c0_i32_1 = arith.constant 0 : i32
    return %c0_i32, %c0_i32_0 : i32, i32
  }
  func.func @transform_2(%arg0: i32) -> (i32, i32) {
    %c0_i32 = arith.constant 0 : i32
    %c0_i32_0 = arith.constant 0 : i32
    %c0_i32_1 = arith.constant 0 : i32
    return %c0_i32, %c0_i32_0 : i32, i32
  }
  func.func @transform_3(%arg0: i32) -> (i32, i32) {
    %c0_i32 = arith.constant 0 : i32
    %c0_i32_0 = arith.constant 0 : i32
    %c0_i32_1 = arith.constant 0 : i32
    return %c0_i32, %c0_i32_0 : i32, i32
  }
  func.func @transform_4(%arg0: i32) -> (i32, i32) {
    %c0_i32 = arith.constant 0 : i32
    %c0_i32_0 = arith.constant 0 : i32
    %c0_i32_1 = arith.constant 0 : i32
    return %c0_i32, %c0_i32_0 : i32, i32
  }
  func.func @transform_5(%arg0: i32) -> (i32, i32) {
    %c0_i32 = arith.constant 0 : i32
    %c0_i32_0 = arith.constant 0 : i32
    return %arg0, %c0_i32 : i32, i32
  }
}

</mosaic_0001>

<llo_original>
// kernel: dqn_forward.4
$region0: #{dqn_forward.4}
  #allocation0 [shape = 'u32[]', space=smem, size = 0x4, offset = 0x4, fixed_abs, tag = 'smem constant byte address 0x4 - core index']
  #allocation1 [shape = 'u32[144,128]{1,0:T(1,128)}', space=vmem, size = 0x12000, scoped, tag = 'internal scratch']
  %s0 = inlined_call_operand.vmem [shape: bf16[512,256], index: 0, kind: input, shape index: {}]
  %s1 = inlined_call_operand.vmem [shape: bf16[256,128], index: 1, kind: input, shape index: {}]
  %s2 = inlined_call_operand.vmem [shape: f32[1,128], index: 2, kind: input, shape index: {}]
  %s3 = inlined_call_operand.vmem [shape: bf16[512,128], index: 3, kind: output, shape index: {}]
  %s4 = sld [smem:[#allocation0]]
  $region45: #{dqn_forward.4} parent=0
    _
  %s6 = ssub.s32 1, %s4
  %s7 = scalar_select 0, %s6, %s4
  loop: start=0, step=1, limit=4
  $region2: #{dqn_forward.4} parent=0 // loop_pre_header
    _
  $region3: #{dqn_forward.4} parent=0 // loop_header
    %s9 = sphi 0, %s13
    %p10 = scmp.ge.s32.totalorder %s9, 4
    %s19 = sphi 0, %s21
    %s22 = sphi 0, %s19
    %s23 = sphi 0, %s22
    %s39 = sphi 0, %s23
    %s43 = sphi 0, %s43
    %s45 = sphi 0, %s43
    %s46 = sphi 0, %s45
    %s60 = sphi 0, %s46
    %s64 = sphi 0, %s64
    %s66 = sphi 0, %s64
    %s67 = sphi 0, %s66
    %s81 = sphi 0, %s67
    %s87 = sphi 0, %s89
    %s90 = sphi 0, %s87
    %s91 = sphi 0, %s90
    %s107 = sphi 0, %s91
  $region4: #{dqn_forward.4} parent=0 // loop_header_branch
    %12 = sbr.rel (%p10) target = $region8
  $region5: #{dqn_forward.4} parent=0 // loop_body
    %s14 = ssub.s32 %s9, 1
    %s15 = ssub.s32 %s9, 2
    %s16 = sadd.s32 %s9, 1
    %s17 = ssub.s32 %s9, %s16
    %p18 = scmp.eq.s32.totalorder %s17, 0
    %s20 = sadd.s32 %s19, 1
    %s21 = scalar_select %p18, %s19, %s20
    %p24 = pneg %p18
    %p25 = scmp.eq.s32.totalorder %s9, 1
    %p26 = por %p24, %p25
    %p27 = scmp.ne.s32.totalorder %s19, %s22
    %p28 = scmp.eq.s32.totalorder %s9, 0
    %p29 = por %p27, %p28
    %p30 = scmp.ne.s32.totalorder %s19, %s22
    %p31 = scmp.eq.s32.totalorder %s14, 1
    %p32 = por %p30, %p31
    %p33 = scmp.ne.s32.totalorder %s22, %s23
    %p34 = scmp.eq.s32.totalorder %s14, 0
    %p35 = por %p33, %p34
    %p36 = scmp.ne.s32.totalorder %s22, %s23
    %p37 = scmp.eq.s32.totalorder %s15, 1
    %p38 = por %p36, %p37
    %p40 = scmp.ne.s32.totalorder %s23, %s39
    %p41 = scmp.eq.s32.totalorder %s15, 0
    %p42 = por %p40, %p41
    %s44 = sadd.s32 %s43, 1
    %p47 = scmp.eq.s32.totalorder %s9, 1
    %p48 = scmp.ne.s32.totalorder %s43, %s45
    %p49 = scmp.eq.s32.totalorder %s9, 0
    %p50 = por %p48, %p49
    %p51 = scmp.ne.s32.totalorder %s43, %s45
    %p52 = scmp.eq.s32.totalorder %s14, 1
    %p53 = por %p51, %p52
    %p54 = scmp.ne.s32.totalorder %s45, %s46
    %p55 = scmp.eq.s32.totalorder %s14, 0
    %p56 = por %p54, %p55
    %p57 = scmp.ne.s32.totalorder %s45, %s46
    %p58 = scmp.eq.s32.totalorder %s15, 1
    %p59 = por %p57, %p58
    %p61 = scmp.ne.s32.totalorder %s46, %s60
    %p62 = scmp.eq.s32.totalorder %s15, 0
    %p63 = por %p61, %p62
    %s65 = sadd.s32 %s64, 1
    %p68 = scmp.eq.s32.totalorder %s9, 1
    %p69 = scmp.ne.s32.totalorder %s64, %s66
    %p70 = scmp.eq.s32.totalorder %s9, 0
    %p71 = por %p69, %p70
    %p72 = scmp.ne.s32.totalorder %s64, %s66
    %p73 = scmp.eq.s32.totalorder %s14, 1
    %p74 = por %p72, %p73
    %p75 = scmp.ne.s32.totalorder %s66, %s67
    %p76 = scmp.eq.s32.totalorder %s14, 0
    %p77 = por %p75, %p76
    %p78 = scmp.ne.s32.totalorder %s66, %s67
    %p79 = scmp.eq.s32.totalorder %s15, 1
    %p80 = por %p78, %p79
    %p82 = scmp.ne.s32.totalorder %s67, %s81
    %p83 = scmp.eq.s32.totalorder %s15, 0
    %p84 = por %p82, %p83
    %s85 = ssub.s32 %s9, %s16
    %p86 = scmp.eq.s32.totalorder %s85, 0
    %s88 = sadd.s32 %s87, 1
    %s89 = scalar_select %p86, %s87, %s88
    %p92 = pneg %p86
    %p93 = scmp.eq.s32.totalorder %s9, 1
    %p94 = por %p92, %p93
    %p95 = scmp.ne.s32.totalorder %s87, %s90
    %p96 = scmp.eq.s32.totalorder %s9, 0
    %p97 = por %p95, %p96
    %p98 = scmp.ne.s32.totalorder %s87, %s90
    %p99 = scmp.eq.s32.totalorder %s14, 1
    %p100 = por %p98, %p99
    %p101 = scmp.ne.s32.totalorder %s90, %s91
    %p102 = scmp.eq.s32.totalorder %s14, 0
    %p103 = por %p101, %p102
    %p104 = scmp.ne.s32.totalorder %s90, %s91
    %p105 = scmp.eq.s32.totalorder %s15, 1
    %p106 = por %p104, %p105
    %p108 = scmp.ne.s32.totalorder %s91, %s107
    %p109 = scmp.eq.s32.totalorder %s15, 0
    %p110 = por %p108, %p109
    %p111 = scmp.le.s32.totalorder 1, %s9
    %p112 = scmp.lt.s32.totalorder %s9, 3
    %p113 = pnand %p111, %p112
    %p114 = pneg %p113
    // Predicated region
    $region9: #{dqn_forward.4} parent=5 // pred_check
      _
    $region10: #{dqn_forward.4} parent=5 // pred_check_branch
      %116 = sbr.rel (%p113) target = $region12
    $region11: #{dqn_forward.4} parent=5 // pred_region
      %s117 = ssub.s32 %s9, 1
      // Predicated region
      $region13: #{dqn_forward.4} parent=11 // pred_check
        %p118 = pneg %p56
      $region14: #{dqn_forward.4} parent=11 // pred_check_branch
        %120 = sbr.rel (%p118) target = $region16
      $region15: #{dqn_forward.4} parent=11 // pred_region
        _
      $region16: #{dqn_forward.4} parent=11 // pred_fallthru
        _
      // Predicated region
      $region17: #{dqn_forward.4} parent=11 // pred_check
        %p121 = pneg %p77
      $region18: #{dqn_forward.4} parent=11 // pred_check_branch
        %123 = sbr.rel (%p121) target = $region20
      $region19: #{dqn_forward.4} parent=11 // pred_region
        _
      $region20: #{dqn_forward.4} parent=11 // pred_fallthru
        _
    $region12: #{dqn_forward.4} parent=5 // pred_fallthru
      _
    %p124 = scmp.lt.s32.totalorder %s9, 2
    // Predicated region
    $region21: #{dqn_forward.4} parent=5 // pred_check
      %p125 = pneg %p124
    $region22: #{dqn_forward.4} parent=5 // pred_check_branch
      %127 = sbr.rel (%p125) target = $region24
    $region23: #{dqn_forward.4} parent=5 // pred_region
      // Predicated region
      $region25: #{dqn_forward.4} parent=23 // pred_check
        %p128 = pneg %p29
      $region26: #{dqn_forward.4} parent=23 // pred_check_branch
        %130 = sbr.rel (%p128) target = $region28
      $region27: #{dqn_forward.4} parent=23 // pred_region
        %s131 = smul.u32 32, %s9
        %p132 = scmp.lt.s32.totalorder %s131, 63
        %s133 = scalar_select %p132, %s131, 63
        %s134 = smul.addr %s133, 2
        %s135 = smul.addr %s134, 4
        %s136 = scalar_lea.vmem %s0, %s135
        %s137 = smul.u32 32, %s9
      $region28: #{dqn_forward.4} parent=23 // pred_fallthru
        _
    $region24: #{dqn_forward.4} parent=5 // pred_fallthru
      _
    %p138 = scmp.le.s32.totalorder 1, %s9
    %p139 = scmp.lt.s32.totalorder %s9, 3
    %p140 = pnand %p138, %p139
    %p141 = pneg %p140
    // Predicated region
    $region29: #{dqn_forward.4} parent=5 // pred_check
      _
    $region30: #{dqn_forward.4} parent=5 // pred_check_branch
      %143 = sbr.rel (%p140) target = $region32
    $region31: #{dqn_forward.4} parent=5 // pred_region
      %s144 = ssub.s32 %s9, 1
      %s145 = smul.u32 32, %s14
      %p146 = scmp.lt.s32.totalorder %s145, 63
      %s147 = scalar_select %p146, %s145, 63
      %s148 = smul.addr %s147, 2
      %s149 = smul.addr %s148, 4
      %s150 = scalar_lea.vmem %s0, %s149
      %p151 = pneg %p35
      %p152 = pneg %p32
      %p153 = pneg %p56
      %p154 = pneg %p53
      %p155 = pneg %p77
      %p156 = pneg %p74
      %p157 = pneg %p103
      %p158 = pneg %p100
      %s159 = smul.u32 32, %s14
      %p160 = scmp.lt.s32.totalorder %s159, 63
      %s161 = scalar_select %p160, %s159, 63
      %s162 = smul.addr %s161, 4
      %s163 = scalar_lea.vmem %s3, %s162
      %s164 = smul.u32 32, %s14
      %p165 = scmp.lt.s32.totalorder %s164, 63
      %s166 = scalar_select %p165, %s164, 63
      %s167 = smul.addr %s166, 2
      %s168 = smul.addr %s167, 4
      %s169 = scalar_lea.vmem %s0, %s168
      %s170 = smul.u32 32, %s14
      %s171 = smul.u32 32, %s14
      %p172 = scmp.lt.s32.totalorder %s171, 63
      %s173 = scalar_select %p172, %s171, 63
      %s174 = smul.addr %s173, 4
      %s175 = scalar_lea.vmem %s3, %s174
      %s176 = smul.u32 32, %s14
      %v178 = vld [vmem:[%s169] sm:$0xff]
      %v179 = vld [vmem:[%s169 + $0x8] sm:$0xff]
      %v180 = vld [vmem:[%s169 + $0x10] sm:$0xff]
      %v181 = vld [vmem:[%s169 + $0x18] sm:$0xff]
      %v182 = vld [vmem:[%s169 + $0x20] sm:$0xff]
      %v183 = vld [vmem:[%s169 + $0x28] sm:$0xff]
      %v184 = vld [vmem:[%s169 + $0x30] sm:$0xff]
      %v185 = vld [vmem:[%s169 + $0x38] sm:$0xff]
      %v186 = vld [vmem:[%s169 + $0x40] sm:$0xff]
      %v187 = vld [vmem:[%s169 + $0x48] sm:$0xff]
      %v188 = vld [vmem:[%s169 + $0x50] sm:$0xff]
      %v189 = vld [vmem:[%s169 + $0x58] sm:$0xff]
      %v190 = vld [vmem:[%s169 + $0x60] sm:$0xff]
      %v191 = vld [vmem:[%s169 + $0x68] sm:$0xff]
      %v192 = vld [vmem:[%s169 + $0x70] sm:$0xff]
      %v193 = vld [vmem:[%s169 + $0x78] sm:$0xff]
      %v194 = vld [vmem:[%s169 + $0x80] sm:$0xff]
      %v195 = vld [vmem:[%s169 + $0x88] sm:$0xff]
      %v196 = vld [vmem:[%s169 + $0x90] sm:$0xff]
      %v197 = vld [vmem:[%s169 + $0x98] sm:$0xff]
      %v198 = vld [vmem:[%s169 + $0xa0] sm:$0xff]
      %v199 = vld [vmem:[%s169 + $0xa8] sm:$0xff]
      %v200 = vld [vmem:[%s169 + $0xb0] sm:$0xff]
      %v201 = vld [vmem:[%s169 + $0xb8] sm:$0xff]
      %v202 = vld [vmem:[%s169 + $0xc0] sm:$0xff]
      %v203 = vld [vmem:[%s169 + $0xc8] sm:$0xff]
      %v204 = vld [vmem:[%s169 + $0xd0] sm:$0xff]
      %v205 = vld [vmem:[%s169 + $0xd8] sm:$0xff]
      %v206 = vld [vmem:[%s169 + $0xe0] sm:$0xff]
      %v207 = vld [vmem:[%s169 + $0xe8] sm:$0xff]
      %v208 = vld [vmem:[%s169 + $0xf0] sm:$0xff]
      %v209 = vld [vmem:[%s169 + $0xf8] sm:$0xff]
      %v210 = vld [vmem:[%s1] sm:$0xf]
      %v211 = vld [vmem:[%s1 + $0x4] sm:$0xf]
      %v212 = vld [vmem:[%s1 + $0x8] sm:$0xf]
      %v213 = vld [vmem:[%s1 + $0xc] sm:$0xf]
      %v214 = vld [vmem:[%s1 + $0x10] sm:$0xf]
      %v215 = vld [vmem:[%s1 + $0x14] sm:$0xf]
      %v216 = vld [vmem:[%s1 + $0x18] sm:$0xf]
      %v217 = vld [vmem:[%s1 + $0x1c] sm:$0xf]
      %v218 = vld [vmem:[%s1 + $0x20] sm:$0xf]
      %v219 = vld [vmem:[%s1 + $0x24] sm:$0xf]
      %v220 = vld [vmem:[%s1 + $0x28] sm:$0xf]
      %v221 = vld [vmem:[%s1 + $0x2c] sm:$0xf]
      %v222 = vld [vmem:[%s1 + $0x30] sm:$0xf]
      %v223 = vld [vmem:[%s1 + $0x34] sm:$0xf]
      %v224 = vld [vmem:[%s1 + $0x38] sm:$0xf]
      %v225 = vld [vmem:[%s1 + $0x3c] sm:$0xf]
      %v226 = vld [vmem:[%s1 + $0x40] sm:$0xf]
      %v227 = vld [vmem:[%s1 + $0x44] sm:$0xf]
      %v228 = vld [vmem:[%s1 + $0x48] sm:$0xf]
      %v229 = vld [vmem:[%s1 + $0x4c] sm:$0xf]
      %v230 = vld [vmem:[%s1 + $0x50] sm:$0xf]
      %v231 = vld [vmem:[%s1 + $0x54] sm:$0xf]
      %v232 = vld [vmem:[%s1 + $0x58] sm:$0xf]
      %v233 = vld [vmem:[%s1 + $0x5c] sm:$0xf]
      %v234 = vld [vmem:[%s1 + $0x60] sm:$0xf]
      %v235 = vld [vmem:[%s1 + $0x64] sm:$0xf]
      %v236 = vld [vmem:[%s1 + $0x68] sm:$0xf]
      %v237 = vld [vmem:[%s1 + $0x6c] sm:$0xf]
      %v238 = vld [vmem:[%s1 + $0x70] sm:$0xf]
      %v239 = vld [vmem:[%s1 + $0x74] sm:$0xf]
      %v240 = vld [vmem:[%s1 + $0x78] sm:$0xf]
      %v241 = vld [vmem:[%s1 + $0x7c] sm:$0xf]
      %v242 = vld [vmem:[%s2] sm:$0x1]
      %v244 = vlaneseq
      %v245 = vshrl.u32 %v244, 7
      %v246 = vsub.s32 0, %v245
      %v247 = vrot.slane %v242, %v246
      %v281 = vunpack.c.l.b16 %v178
      %v282 = vunpack.c.h.b16 %v178
      %v283 = vunpack.c.l.b16 %v179
      %v284 = vunpack.c.h.b16 %v179
      %v285 = vunpack.c.l.b16 %v180
      %v286 = vunpack.c.h.b16 %v180
      %v287 = vunpack.c.l.b16 %v181
      %v288 = vunpack.c.h.b16 %v181
      %v289 = vunpack.c.l.b16 %v182
      %v290 = vunpack.c.h.b16 %v182
      %v291 = vunpack.c.l.b16 %v183
      %v292 = vunpack.c.h.b16 %v183
      %v293 = vunpack.c.l.b16 %v184
      %v294 = vunpack.c.h.b16 %v184
      %v295 = vunpack.c.l.b16 %v185
      %v296 = vunpack.c.h.b16 %v185
      %v297 = vunpack.c.l.b16 %v186
      %v298 = vunpack.c.h.b16 %v186
      %v299 = vunpack.c.l.b16 %v187
      %v300 = vunpack.c.h.b16 %v187
      %v301 = vunpack.c.l.b16 %v188
      %v302 = vunpack.c.h.b16 %v188
      %v303 = vunpack.c.l.b16 %v189
      %v304 = vunpack.c.h.b16 %v189
      %v305 = vunpack.c.l.b16 %v190
      %v306 = vunpack.c.h.b16 %v190
      %v307 = vunpack.c.l.b16 %v191
      %v308 = vunpack.c.h.b16 %v191
      %v309 = vunpack.c.l.b16 %v192
      %v310 = vunpack.c.h.b16 %v192
      %v311 = vunpack.c.l.b16 %v193
      %v312 = vunpack.c.h.b16 %v193
      %v313 = vunpack.c.l.b16 %v194
      %v314 = vunpack.c.h.b16 %v194
      %v315 = vunpack.c.l.b16 %v195
      %v316 = vunpack.c.h.b16 %v195
      %v317 = vunpack.c.l.b16 %v196
      %v318 = vunpack.c.h.b16 %v196
      %v319 = vunpack.c.l.b16 %v197
      %v320 = vunpack.c.h.b16 %v197
      %v321 = vunpack.c.l.b16 %v198
      %v322 = vunpack.c.h.b16 %v198
      %v323 = vunpack.c.l.b16 %v199
      %v324 = vunpack.c.h.b16 %v199
      %v325 = vunpack.c.l.b16 %v200
      %v326 = vunpack.c.h.b16 %v200
      %v327 = vunpack.c.l.b16 %v201
      %v328 = vunpack.c.h.b16 %v201
      %v329 = vunpack.c.l.b16 %v202
      %v330 = vunpack.c.h.b16 %v202
      %v331 = vunpack.c.l.b16 %v203
      %v332 = vunpack.c.h.b16 %v203
      %v333 = vunpack.c.l.b16 %v204
      %v334 = vunpack.c.h.b16 %v204
      %v335 = vunpack.c.l.b16 %v205
      %v336 = vunpack.c.h.b16 %v205
      %v337 = vunpack.c.l.b16 %v206
      %v338 = vunpack.c.h.b16 %v206
      %v339 = vunpack.c.l.b16 %v207
      %v340 = vunpack.c.h.b16 %v207
      %v341 = vunpack.c.l.b16 %v208
      %v342 = vunpack.c.h.b16 %v208
      %v343 = vunpack.c.l.b16 %v209
      %v344 = vunpack.c.h.b16 %v209
      %v345 = vpack.c.b16 %v283, %v281
      %v346 = vpack.c.b16 %v284, %v282
      %v347 = vpack.c.b16 %v287, %v285
      %v348 = vpack.c.b16 %v288, %v286
      %v349 = vpack.c.b16 %v291, %v289
      %v350 = vpack.c.b16 %v292, %v290
      %v351 = vpack.c.b16 %v295, %v293
      %v352 = vpack.c.b16 %v296, %v294
      %v353 = vpack.c.b16 %v299, %v297
      %v354 = vpack.c.b16 %v300, %v298
      %v355 = vpack.c.b16 %v303, %v301
      %v356 = vpack.c.b16 %v304, %v302
      %v357 = vpack.c.b16 %v307, %v305
      %v358 = vpack.c.b16 %v308, %v306
      %v359 = vpack.c.b16 %v311, %v309
      %v360 = vpack.c.b16 %v312, %v310
      %v361 = vpack.c.b16 %v315, %v313
      %v362 = vpack.c.b16 %v316, %v314
      %v363 = vpack.c.b16 %v319, %v317
      %v364 = vpack.c.b16 %v320, %v318
      %v365 = vpack.c.b16 %v323, %v321
      %v366 = vpack.c.b16 %v324, %v322
      %v367 = vpack.c.b16 %v327, %v325
      %v368 = vpack.c.b16 %v328, %v326
      %v369 = vpack.c.b16 %v331, %v329
      %v370 = vpack.c.b16 %v332, %v330
      %v371 = vpack.c.b16 %v335, %v333
      %v372 = vpack.c.b16 %v336, %v334
      %v373 = vpack.c.b16 %v339, %v337
      %v374 = vpack.c.b16 %v340, %v338
      %v375 = vpack.c.b16 %v343, %v341
      %v376 = vpack.c.b16 %v344, %v342
      %v441 = vunpack.c.l.b16 %v210
      %v442 = vunpack.c.l.b16 %v211
      %v443 = vunpack.c.l.b16 %v212
      %v444 = vunpack.c.l.b16 %v213
      %v445 = vunpack.c.l.b16 %v214
      %v446 = vunpack.c.l.b16 %v215
      %v447 = vunpack.c.l.b16 %v216
      %v448 = vunpack.c.l.b16 %v217
      %v449 = vunpack.c.l.b16 %v218
      %v450 = vunpack.c.l.b16 %v219
      %v451 = vunpack.c.l.b16 %v220
      %v452 = vunpack.c.l.b16 %v221
      %v453 = vunpack.c.l.b16 %v222
      %v454 = vunpack.c.l.b16 %v223
      %v455 = vunpack.c.l.b16 %v224
      %v456 = vunpack.c.l.b16 %v225
      %v457 = vunpack.c.l.b16 %v226
      %v458 = vunpack.c.l.b16 %v227
      %v459 = vunpack.c.l.b16 %v228
      %v460 = vunpack.c.l.b16 %v229
      %v461 = vunpack.c.l.b16 %v230
      %v462 = vunpack.c.l.b16 %v231
      %v463 = vunpack.c.l.b16 %v232
      %v464 = vunpack.c.l.b16 %v233
      %v465 = vunpack.c.l.b16 %v234
      %v466 = vunpack.c.l.b16 %v235
      %v467 = vunpack.c.l.b16 %v236
      %v468 = vunpack.c.l.b16 %v237
      %v469 = vunpack.c.l.b16 %v238
      %v470 = vunpack.c.l.b16 %v239
      %v471 = vunpack.c.l.b16 %v240
      %v472 = vunpack.c.l.b16 %v241
      %v473 = vpack.c.b16 %v442, %v441
      %v474 = vpack.c.b16 %v444, %v443
      %v475 = vpack.c.b16 %v446, %v445
      %v476 = vpack.c.b16 %v448, %v447
      %v477 = vpack.c.b16 %v450, %v449
      %v478 = vpack.c.b16 %v452, %v451
      %v479 = vpack.c.b16 %v454, %v453
      %v480 = vpack.c.b16 %v456, %v455
      %v481 = vpack.c.b16 %v458, %v457
      %v482 = vpack.c.b16 %v460, %v459
      %v483 = vpack.c.b16 %v462, %v461
      %v484 = vpack.c.b16 %v464, %v463
      %v485 = vpack.c.b16 %v466, %v465
      %v486 = vpack.c.b16 %v468, %v467
      %v487 = vpack.c.b16 %v470, %v469
      %v488 = vpack.c.b16 %v472, %v471
      %505 = vmatprep.subr.bf16.mxu0 0
      %506 = vmatpush1.bf16.msra.mxu0 %v473
      %507 = vmatprep.subr.bf16.mxu0 0
      %508 = vmatpush1.bf16.msra.mxu0 %v474
      %509 = vmatprep.subr.bf16.mxu0 0
      %510 = vmatpush1.bf16.msra.mxu0 %v475
      %511 = vmatprep.subr.bf16.mxu0 0
      %512 = vmatpush1.bf16.msra.mxu0 %v476
      %513 = vmatprep.subr.bf16.mxu0 0
      %514 = vmatpush1.bf16.msra.mxu0 %v477
      %515 = vmatprep.subr.bf16.mxu0 0
      %516 = vmatpush1.bf16.msra.mxu0 %v478
      %517 = vmatprep.subr.bf16.mxu0 0
      %518 = vmatpush1.bf16.msra.mxu0 %v479
      %519 = vmatprep.subr.bf16.mxu0 0
      %520 = vmatpush1.bf16.msra.mxu0 %v480
      %521 = vmatprep.subr.bf16.mxu0 0
      %522 = vmatpush1.bf16.msra.mxu0 %v481
      %523 = vmatprep.subr.bf16.mxu0 0
      %524 = vmatpush1.bf16.msra.mxu0 %v482
      %525 = vmatprep.subr.bf16.mxu0 0
      %526 = vmatpush1.bf16.msra.mxu0 %v483
      %527 = vmatprep.subr.bf16.mxu0 0
      %528 = vmatpush1.bf16.msra.mxu0 %v484
      %529 = vmatprep.subr.bf16.mxu0 0
      %530 = vmatpush1.bf16.msra.mxu0 %v485
      %531 = vmatprep.subr.bf16.mxu0 0
      %532 = vmatpush1.bf16.msra.mxu0 %v486
      %533 = vmatprep.subr.bf16.mxu0 0
      %534 = vmatpush1.bf16.msra.mxu0 %v487
      %535 = vmatprep.subr.bf16.mxu0 0
      %536 = vmatpush1.bf16.msra.mxu0 %v488
      %537 = vmatprep.mubr.bf16.mxu0 %v346
      %538 = vmatmul.mubr.bf16.gmra.mrb[0].mxu0 %v345
      %v539 = vpop.f32.mrb[0].mxu0
      %v540 = vadd.f32 %v247, %v539
      %v541 = vpop.f32.mrb[0].mxu0
      %v542 = vpop.f32.mrb[0].mxu0
      %v543 = vadd.f32 %v247, %v542
      %v544 = vpop.f32.mrb[0].mxu0
      %545 = vmatprep.mubr.bf16.mxu0 %v348
      %546 = vmatmul.mubr.bf16.gmra.mrb[0].mxu0 %v347
      %v547 = vpop.f32.mrb[0].mxu0
      %v548 = vadd.f32 %v247, %v547
      %v549 = vpop.f32.mrb[0].mxu0
      %v550 = vpop.f32.mrb[0].mxu0
      %v551 = vadd.f32 %v247, %v550
      %v552 = vpop.f32.mrb[0].mxu0
      %553 = vmatprep.mubr.bf16.mxu0 %v350
      %554 = vmatmul.mubr.bf16.gmra.mrb[0].mxu0 %v349
      %v555 = vpop.f32.mrb[0].mxu0
      %v556 = vadd.f32 %v247, %v555
      %v557 = vpop.f32.mrb[0].mxu0
      %v558 = vpop.f32.mrb[0].mxu0
      %v559 = vadd.f32 %v247, %v558
      %v560 = vpop.f32.mrb[0].mxu0
      %561 = vmatprep.mubr.bf16.mxu0 %v352
      %562 = vmatmul.mubr.bf16.gmra.mrb[0].mxu0 %v351
      %v563 = vpop.f32.mrb[0].mxu0
      %v564 = vadd.f32 %v247, %v563
      %v565 = vpop.f32.mrb[0].mxu0
      %v566 = vpop.f32.mrb[0].mxu0
      %v567 = vadd.f32 %v247, %v566
      %v568 = vpop.f32.mrb[0].mxu0
      %569 = vmatprep.mubr.bf16.mxu0 %v354
      %570 = vmatmul.mubr.bf16.gmra.mrb[0].mxu0 %v353
      %v571 = vpop.f32.mrb[0].mxu0
      %v572 = vadd.f32 %v247, %v571
      %v573 = vpop.f32.mrb[0].mxu0
      %v574 = vpop.f32.mrb[0].mxu0
      %v575 = vadd.f32 %v247, %v574
      %v576 = vpop.f32.mrb[0].mxu0
      %577 = vmatprep.mubr.bf16.mxu0 %v356
      %578 = vmatmul.mubr.bf16.gmra.mrb[0].mxu0 %v355
      %v579 = vpop.f32.mrb[0].mxu0
      %v580 = vadd.f32 %v247, %v579
      %v581 = vpop.f32.mrb[0].mxu0
      %v582 = vpop.f32.mrb[0].mxu0
      %v583 = vadd.f32 %v247, %v582
      %v584 = vpop.f32.mrb[0].mxu0
      %585 = vmatprep.mubr.bf16.mxu0 %v358
      %586 = vmatmul.mubr.bf16.gmra.mrb[0].mxu0 %v357
      %v587 = vpop.f32.mrb[0].mxu0
      %v588 = vadd.f32 %v247, %v587
      %v589 = vpop.f32.mrb[0].mxu0
      %v590 = vpop.f32.mrb[0].mxu0
      %v591 = vadd.f32 %v247, %v590
      %v592 = vpop.f32.mrb[0].mxu0
      %593 = vmatprep.mubr.bf16.mxu0 %v360
      %594 = vmatmul.mubr.bf16.gmra.mrb[0].mxu0 %v359
      %v595 = vpop.f32.mrb[0].mxu0
      %v596 = vadd.f32 %v247, %v595
      %v597 = vpop.f32.mrb[0].mxu0
      %v598 = vpop.f32.mrb[0].mxu0
      %v599 = vadd.f32 %v247, %v598
      %v600 = vpop.f32.mrb[0].mxu0
      %601 = vmatprep.mubr.bf16.mxu0 %v362
      %602 = vmatmul.mubr.bf16.gmra.mrb[0].mxu0 %v361
      %v603 = vpop.f32.mrb[0].mxu0
      %v604 = vadd.f32 %v247, %v603
      %v605 = vpop.f32.mrb[0].mxu0
      %v606 = vpop.f32.mrb[0].mxu0
      %v607 = vadd.f32 %v247, %v606
      %v608 = vpop.f32.mrb[0].mxu0
      %609 = vmatprep.mubr.bf16.mxu0 %v364
      %610 = vmatmul.mubr.bf16.gmra.mrb[0].mxu0 %v363
      %v611 = vpop.f32.mrb[0].mxu0
      %v612 = vadd.f32 %v247, %v611
      %v613 = vpop.f32.mrb[0].mxu0
      %v614 = vpop.f32.mrb[0].mxu0
      %v615 = vadd.f32 %v247, %v614
      %v616 = vpop.f32.mrb[0].mxu0
      %617 = vmatprep.mubr.bf16.mxu0 %v366
      %618 = vmatmul.mubr.bf16.gmra.mrb[0].mxu0 %v365
      %v619 = vpop.f32.mrb[0].mxu0
      %v620 = vadd.f32 %v247, %v619
      %v621 = vpop.f32.mrb[0].mxu0
      %v622 = vpop.f32.mrb[0].mxu0
      %v623 = vadd.f32 %v247, %v622
      %v624 = vpop.f32.mrb[0].mxu0
      %625 = vmatprep.mubr.bf16.mxu0 %v368
      %626 = vmatmul.mubr.bf16.gmra.mrb[0].mxu0 %v367
      %v627 = vpop.f32.mrb[0].mxu0
      %v628 = vadd.f32 %v247, %v627
      %v629 = vpop.f32.mrb[0].mxu0
      %v630 = vpop.f32.mrb[0].mxu0
      %v631 = vadd.f32 %v247, %v630
      %v632 = vpop.f32.mrb[0].mxu0
      %633 = vmatprep.mubr.bf16.mxu0 %v370
      %634 = vmatmul.mubr.bf16.gmra.mrb[0].mxu0 %v369
      %v635 = vpop.f32.mrb[0].mxu0
      %v636 = vadd.f32 %v247, %v635
      %v637 = vpop.f32.mrb[0].mxu0
      %v638 = vpop.f32.mrb[0].mxu0
      %v639 = vadd.f32 %v247, %v638
      %v640 = vpop.f32.mrb[0].mxu0
      %641 = vmatprep.mubr.bf16.mxu0 %v372
      %642 = vmatmul.mubr.bf16.gmra.mrb[0].mxu0 %v371
      %v643 = vpop.f32.mrb[0].mxu0
      %v644 = vadd.f32 %v247, %v643
      %v645 = vpop.f32.mrb[0].mxu0
      %v646 = vpop.f32.mrb[0].mxu0
      %v647 = vadd.f32 %v247, %v646
      %v648 = vpop.f32.mrb[0].mxu0
      %649 = vmatprep.mubr.bf16.mxu0 %v374
      %650 = vmatmul.mubr.bf16.gmra.mrb[0].mxu0 %v373
      %v651 = vpop.f32.mrb[0].mxu0
      %v652 = vadd.f32 %v247, %v651
      %v653 = vpop.f32.mrb[0].mxu0
      %v654 = vpop.f32.mrb[0].mxu0
      %v655 = vadd.f32 %v247, %v654
      %v656 = vpop.f32.mrb[0].mxu0
      %657 = vmatprep.mubr.bf16.mxu0 %v376
      %658 = vmatmul.mubr.bf16.gmra.mrb[0].mxu0 %v375
      %v659 = vpop.f32.mrb[0].mxu0
      %v660 = vadd.f32 %v247, %v659
      %v661 = vpop.f32.mrb[0].mxu0
      %v662 = vpop.f32.mrb[0].mxu0
      %v663 = vadd.f32 %v247, %v662
      %v664 = vpop.f32.mrb[0].mxu0
      %665 = vdwg.mxu0
      %v666 = vmax.f32 %v540, 0.0
      %v667 = vmax.f32 %v543, 0.0
      %v668 = vmax.f32 %v548, 0.0
      %v669 = vmax.f32 %v551, 0.0
      %v670 = vmax.f32 %v556, 0.0
      %v671 = vmax.f32 %v559, 0.0
      %v672 = vmax.f32 %v564, 0.0
      %v673 = vmax.f32 %v567, 0.0
      %v674 = vmax.f32 %v572, 0.0
      %v675 = vmax.f32 %v575, 0.0
      %v676 = vmax.f32 %v580, 0.0
      %v677 = vmax.f32 %v583, 0.0
      %v678 = vmax.f32 %v588, 0.0
      %v679 = vmax.f32 %v591, 0.0
      %v680 = vmax.f32 %v596, 0.0
      %v681 = vmax.f32 %v599, 0.0
      %v682 = vmax.f32 %v604, 0.0
      %v683 = vmax.f32 %v607, 0.0
      %v684 = vmax.f32 %v612, 0.0
      %v685 = vmax.f32 %v615, 0.0
      %v686 = vmax.f32 %v620, 0.0
      %v687 = vmax.f32 %v623, 0.0
      %v688 = vmax.f32 %v628, 0.0
      %v689 = vmax.f32 %v631, 0.0
      %v690 = vmax.f32 %v636, 0.0
      %v691 = vmax.f32 %v639, 0.0
      %v692 = vmax.f32 %v644, 0.0
      %v693 = vmax.f32 %v647, 0.0
      %v694 = vmax.f32 %v652, 0.0
      %v695 = vmax.f32 %v655, 0.0
      %v696 = vmax.f32 %v660, 0.0
      %v697 = vmax.f32 %v663, 0.0
      %v698 = vpack.c.bf16 %v667, %v666
      %v699 = vpack.c.bf16 %v669, %v668
      %v700 = vpack.c.bf16 %v671, %v670
      %v701 = vpack.c.bf16 %v673, %v672
      %v702 = vpack.c.bf16 %v675, %v674
      %v703 = vpack.c.bf16 %v677, %v676
      %v704 = vpack.c.bf16 %v679, %v678
      %v705 = vpack.c.bf16 %v681, %v680
      %v706 = vpack.c.bf16 %v683, %v682
      %v707 = vpack.c.bf16 %v685, %v684
      %v708 = vpack.c.bf16 %v687, %v686
      %v709 = vpack.c.bf16 %v689, %v688
      %v710 = vpack.c.bf16 %v691, %v690
      %v711 = vpack.c.bf16 %v693, %v692
      %v712 = vpack.c.bf16 %v695, %v694
      %v713 = vpack.c.bf16 %v697, %v696
      %v730 = vunpack.c.l.b16 %v698
      %v731 = vunpack.c.h.b16 %v698
      %v732 = vunpack.c.l.b16 %v699
      %v733 = vunpack.c.h.b16 %v699
      %v734 = vunpack.c.l.b16 %v700
      %v735 = vunpack.c.h.b16 %v700
      %v736 = vunpack.c.l.b16 %v701
      %v737 = vunpack.c.h.b16 %v701
      %v738 = vunpack.c.l.b16 %v702
      %v739 = vunpack.c.h.b16 %v702
      %v740 = vunpack.c.l.b16 %v703
      %v741 = vunpack.c.h.b16 %v703
      %v742 = vunpack.c.l.b16 %v704
      %v743 = vunpack.c.h.b16 %v704
      %v744 = vunpack.c.l.b16 %v705
      %v745 = vunpack.c.h.b16 %v705
      %v746 = vunpack.c.l.b16 %v706
      %v747 = vunpack.c.h.b16 %v706
      %v748 = vunpack.c.l.b16 %v707
      %v749 = vunpack.c.h.b16 %v707
      %v750 = vunpack.c.l.b16 %v708
      %v751 = vunpack.c.h.b16 %v708
      %v752 = vunpack.c.l.b16 %v709
      %v753 = vunpack.c.h.b16 %v709
      %v754 = vunpack.c.l.b16 %v710
      %v755 = vunpack.c.h.b16 %v710
      %v756 = vunpack.c.l.b16 %v711
      %v757 = vunpack.c.h.b16 %v711
      %v758 = vunpack.c.l.b16 %v712
      %v759 = vunpack.c.h.b16 %v712
      %v760 = vunpack.c.l.b16 %v713
      %v761 = vunpack.c.h.b16 %v713
      %v762 = vpack.c.b16 %v730, %v730
      %v763 = vpack.c.b16 %v731, %v731
      %v764 = vpack.c.b16 %v732, %v732
      %v765 = vpack.c.b16 %v733, %v733
      %v766 = vpack.c.b16 %v734, %v734
      %v767 = vpack.c.b16 %v735, %v735
      %v768 = vpack.c.b16 %v736, %v736
      %v769 = vpack.c.b16 %v737, %v737
      %v770 = vpack.c.b16 %v738, %v738
      %v771 = vpack.c.b16 %v739, %v739
      %v772 = vpack.c.b16 %v740, %v740
      %v773 = vpack.c.b16 %v741, %v741
      %v774 = vpack.c.b16 %v742, %v742
      %v775 = vpack.c.b16 %v743, %v743
      %v776 = vpack.c.b16 %v744, %v744
      %v777 = vpack.c.b16 %v745, %v745
      %v778 = vpack.c.b16 %v746, %v746
      %v779 = vpack.c.b16 %v747, %v747
      %v780 = vpack.c.b16 %v748, %v748
      %v781 = vpack.c.b16 %v749, %v749
      %v782 = vpack.c.b16 %v750, %v750
      %v783 = vpack.c.b16 %v751, %v751
      %v784 = vpack.c.b16 %v752, %v752
      %v785 = vpack.c.b16 %v753, %v753
      %v786 = vpack.c.b16 %v754, %v754
      %v787 = vpack.c.b16 %v755, %v755
      %v788 = vpack.c.b16 %v756, %v756
      %v789 = vpack.c.b16 %v757, %v757
      %v790 = vpack.c.b16 %v758, %v758
      %v791 = vpack.c.b16 %v759, %v759
      %v792 = vpack.c.b16 %v760, %v760
      %v793 = vpack.c.b16 %v761, %v761
      %826 = vst [vmem:[%s175] sm:$0xf] %v762
      %827 = vst [vmem:[%s175 + $0x4] sm:$0xf] %v763
      %828 = vst [vmem:[%s175 + $0x8] sm:$0xf] %v764
      %829 = vst [vmem:[%s175 + $0xc] sm:$0xf] %v765
      %830 = vst [vmem:[%s175 + $0x10] sm:$0xf] %v766
      %831 = vst [vmem:[%s175 + $0x14] sm:$0xf] %v767
      %832 = vst [vmem:[%s175 + $0x18] sm:$0xf] %v768
      %833 = vst [vmem:[%s175 + $0x1c] sm:$0xf] %v769
      %834 = vst [vmem:[%s175 + $0x20] sm:$0xf] %v770
      %835 = vst [vmem:[%s175 + $0x24] sm:$0xf] %v771
      %836 = vst [vmem:[%s175 + $0x28] sm:$0xf] %v772
      %837 = vst [vmem:[%s175 + $0x2c] sm:$0xf] %v773
      %838 = vst [vmem:[%s175 + $0x30] sm:$0xf] %v774
      %839 = vst [vmem:[%s175 + $0x34] sm:$0xf] %v775
      %840 = vst [vmem:[%s175 + $0x38] sm:$0xf] %v776
      %841 = vst [vmem:[%s175 + $0x3c] sm:$0xf] %v777
      %842 = vst [vmem:[%s175 + $0x40] sm:$0xf] %v778
      %843 = vst [vmem:[%s175 + $0x44] sm:$0xf] %v779
      %844 = vst [vmem:[%s175 + $0x48] sm:$0xf] %v780
      %845 = vst [vmem:[%s175 + $0x4c] sm:$0xf] %v781
      %846 = vst [vmem:[%s175 + $0x50] sm:$0xf] %v782
      %847 = vst [vmem:[%s175 + $0x54] sm:$0xf] %v783
      %848 = vst [vmem:[%s175 + $0x58] sm:$0xf] %v784
      %849 = vst [vmem:[%s175 + $0x5c] sm:$0xf] %v785
      %850 = vst [vmem:[%s175 + $0x60] sm:$0xf] %v786
      %851 = vst [vmem:[%s175 + $0x64] sm:$0xf] %v787
      %852 = vst [vmem:[%s175 + $0x68] sm:$0xf] %v788
      %853 = vst [vmem:[%s175 + $0x6c] sm:$0xf] %v789
      %854 = vst [vmem:[%s175 + $0x70] sm:$0xf] %v790
      %855 = vst [vmem:[%s175 + $0x74] sm:$0xf] %v791
      %856 = vst [vmem:[%s175 + $0x78] sm:$0xf] %v792
      %857 = vst [vmem:[%s175 + $0x7c] sm:$0xf] %v793
      %s858 = smul.u32 32, %s14
      %p859 = scmp.lt.s32.totalorder %s858, 63
      %s860 = scalar_select %p859, %s858, 63
      %s861 = smul.addr %s860, 4
      %s862 = scalar_lea.vmem %s3, %s861
      // Predicated region
      $region33: #{dqn_forward.4} parent=31 // pred_check
        %p863 = pneg %p100
      $region34: #{dqn_forward.4} parent=31 // pred_check_branch
        %865 = sbr.rel (%p863) target = $region36
      $region35: #{dqn_forward.4} parent=31 // pred_region
        %s866 = smul.u32 32, %s14
      $region36: #{dqn_forward.4} parent=31 // pred_fallthru
        _
    $region32: #{dqn_forward.4} parent=5 // pred_fallthru
      _
    %p867 = scmp.le.s32.totalorder 2, %s9
    // Predicated region
    $region37: #{dqn_forward.4} parent=5 // pred_check
      %p868 = pneg %p867
    $region38: #{dqn_forward.4} parent=5 // pred_check_branch
      %870 = sbr.rel (%p868) target = $region40
    $region39: #{dqn_forward.4} parent=5 // pred_region
      %s871 = ssub.s32 %s9, 2
      // Predicated region
      $region41: #{dqn_forward.4} parent=39 // pred_check
        %p872 = pneg %p106
      $region42: #{dqn_forward.4} parent=39 // pred_check_branch
        %874 = sbr.rel (%p872) target = $region44
      $region43: #{dqn_forward.4} parent=39 // pred_region
        %s875 = smul.u32 32, %s15
        %p876 = scmp.lt.s32.totalorder %s875, 63
        %s877 = scalar_select %p876, %s875, 63
        %s878 = smul.addr %s877, 4
        %s879 = scalar_lea.vmem %s3, %s878
      $region44: #{dqn_forward.4} parent=39 // pred_fallthru
        _
    $region40: #{dqn_forward.4} parent=5 // pred_fallthru
      _
  $region6: #{dqn_forward.4} parent=0 // loop_footer
    %s13 = sadd.s32 1, %s9
  $region7: #{dqn_forward.4} parent=0 // loop_footer_branch
    %8 = sbr.rel target = $region3
  $region8: #{dqn_forward.4} parent=0 // loop_exit
    _

// kernel: dqn_forward.5
$region0: #{dqn_forward.5}
  #allocation0 [shape = 'u32[]', space=smem, size = 0x4, offset = 0x4, fixed_abs, tag = 'smem constant byte address 0x4 - core index']
  #allocation1 [shape = 'u32[144,128]{1,0:T(1,128)}', space=vmem, size = 0x12000, scoped, tag = 'internal scratch']
  %s0 = inlined_call_operand.vmem [shape: bf16[72,256], index: 0, kind: input, shape index: {}]
  %s1 = inlined_call_operand.vmem [shape: bf16[256,128], index: 1, kind: input, shape index: {}]
  %s2 = inlined_call_operand.vmem [shape: f32[1,128], index: 2, kind: input, shape index: {}]
  %s3 = inlined_call_operand.vmem [shape: bf16[72,128], index: 3, kind: output, shape index: {}]
  %s4 = sld [smem:[#allocation0]]
  $region22: #{dqn_forward.5} parent=0
    _
  %s6 = ssub.s32 1, %s4
  %s7 = scalar_select 0, %s6, %s4
  // Predicated region
  $region2: #{dqn_forward.5} parent=0 // pred_check
    _
  $region3: #{dqn_forward.5} parent=0 // pred_check_branch
    %9 = sbr.rel (0) target = $region5
  $region4: #{dqn_forward.5} parent=0 // pred_region
    _
  $region5: #{dqn_forward.5} parent=0 // pred_fallthru
    _
  // Predicated region
  $region6: #{dqn_forward.5} parent=0 // pred_check
    _
  $region7: #{dqn_forward.5} parent=0 // pred_check_branch
    %11 = sbr.rel (0) target = $region9
  $region8: #{dqn_forward.5} parent=0 // pred_region
    _
  $region9: #{dqn_forward.5} parent=0 // pred_fallthru
    _
  // Predicated region
  $region10: #{dqn_forward.5} parent=0 // pred_check
    _
  $region11: #{dqn_forward.5} parent=0 // pred_check_branch
    %13 = sbr.rel (0) target = $region13
  $region12: #{dqn_forward.5} parent=0 // pred_region
    _
  $region13: #{dqn_forward.5} parent=0 // pred_fallthru
    _
  %v15 = vld [vmem:[%s0] sm:$0xff]
  %v16 = vld [vmem:[%s0 + $0x8] sm:$0xff]
  %v17 = vld [vmem:[%s0 + $0x10] sm:$0xff]
  %v18 = vld [vmem:[%s0 + $0x18] sm:$0xff]
  %v19 = vld [vmem:[%s0 + $0x20] sm:$0xff]
  %v20 = vld [vmem:[%s0 + $0x28] sm:$0xff]
  %v21 = vld [vmem:[%s0 + $0x30] sm:$0xff]
  %v22 = vld [vmem:[%s0 + $0x38] sm:$0xff]
  %v23 = vld [vmem:[%s0 + $0x40] sm:$0xff]
  %v24 = vld [vmem:[%s1] sm:$0xf]
  %v25 = vld [vmem:[%s1 + $0x4] sm:$0xf]
  %v26 = vld [vmem:[%s1 + $0x8] sm:$0xf]
  %v27 = vld [vmem:[%s1 + $0xc] sm:$0xf]
  %v28 = vld [vmem:[%s1 + $0x10] sm:$0xf]
  %v29 = vld [vmem:[%s1 + $0x14] sm:$0xf]
  %v30 = vld [vmem:[%s1 + $0x18] sm:$0xf]
  %v31 = vld [vmem:[%s1 + $0x1c] sm:$0xf]
  %v32 = vld [vmem:[%s1 + $0x20] sm:$0xf]
  %v33 = vld [vmem:[%s1 + $0x24] sm:$0xf]
  %v34 = vld [vmem:[%s1 + $0x28] sm:$0xf]
  %v35 = vld [vmem:[%s1 + $0x2c] sm:$0xf]
  %v36 = vld [vmem:[%s1 + $0x30] sm:$0xf]
  %v37 = vld [vmem:[%s1 + $0x34] sm:$0xf]
  %v38 = vld [vmem:[%s1 + $0x38] sm:$0xf]
  %v39 = vld [vmem:[%s1 + $0x3c] sm:$0xf]
  %v40 = vld [vmem:[%s1 + $0x40] sm:$0xf]
  %v41 = vld [vmem:[%s1 + $0x44] sm:$0xf]
  %v42 = vld [vmem:[%s1 + $0x48] sm:$0xf]
  %v43 = vld [vmem:[%s1 + $0x4c] sm:$0xf]
  %v44 = vld [vmem:[%s1 + $0x50] sm:$0xf]
  %v45 = vld [vmem:[%s1 + $0x54] sm:$0xf]
  %v46 = vld [vmem:[%s1 + $0x58] sm:$0xf]
  %v47 = vld [vmem:[%s1 + $0x5c] sm:$0xf]
  %v48 = vld [vmem:[%s1 + $0x60] sm:$0xf]
  %v49 = vld [vmem:[%s1 + $0x64] sm:$0xf]
  %v50 = vld [vmem:[%s1 + $0x68] sm:$0xf]
  %v51 = vld [vmem:[%s1 + $0x6c] sm:$0xf]
  %v52 = vld [vmem:[%s1 + $0x70] sm:$0xf]
  %v53 = vld [vmem:[%s1 + $0x74] sm:$0xf]
  %v54 = vld [vmem:[%s1 + $0x78] sm:$0xf]
  %v55 = vld [vmem:[%s1 + $0x7c] sm:$0xf]
  %v56 = vld [vmem:[%s2] sm:$0x1]
  %v58 = vlaneseq
  %v59 = vshrl.u32 %v58, 7
  %v60 = vsub.s32 0, %v59
  %v61 = vrot.slane %v56, %v60
  %v72 = vunpack.c.l.b16 %v15
  %v73 = vunpack.c.h.b16 %v15
  %v74 = vunpack.c.l.b16 %v16
  %v75 = vunpack.c.h.b16 %v16
  %v76 = vunpack.c.l.b16 %v17
  %v77 = vunpack.c.h.b16 %v17
  %v78 = vunpack.c.l.b16 %v18
  %v79 = vunpack.c.h.b16 %v18
  %v80 = vunpack.c.l.b16 %v19
  %v81 = vunpack.c.h.b16 %v19
  %v82 = vunpack.c.l.b16 %v20
  %v83 = vunpack.c.h.b16 %v20
  %v84 = vunpack.c.l.b16 %v21
  %v85 = vunpack.c.h.b16 %v21
  %v86 = vunpack.c.l.b16 %v22
  %v87 = vunpack.c.h.b16 %v22
  %v88 = vunpack.c.l.b16 %v23
  %v89 = vunpack.c.h.b16 %v23
  %v90 = vpack.c.b16 %v74, %v72
  %v91 = vpack.c.b16 %v75, %v73
  %v92 = vpack.c.b16 %v78, %v76
  %v93 = vpack.c.b16 %v79, %v77
  %v94 = vpack.c.b16 %v82, %v80
  %v95 = vpack.c.b16 %v83, %v81
  %v96 = vpack.c.b16 %v86, %v84
  %v97 = vpack.c.b16 %v87, %v85
  %v98 = vpack.c.b16 %v88, %v88
  %v99 = vpack.c.b16 %v89, %v89
  %v142 = vunpack.c.l.b16 %v24
  %v143 = vunpack.c.l.b16 %v25
  %v144 = vunpack.c.l.b16 %v26
  %v145 = vunpack.c.l.b16 %v27
  %v146 = vunpack.c.l.b16 %v28
  %v147 = vunpack.c.l.b16 %v29
  %v148 = vunpack.c.l.b16 %v30
  %v149 = vunpack.c.l.b16 %v31
  %v150 = vunpack.c.l.b16 %v32
  %v151 = vunpack.c.l.b16 %v33
  %v152 = vunpack.c.l.b16 %v34
  %v153 = vunpack.c.l.b16 %v35
  %v154 = vunpack.c.l.b16 %v36
  %v155 = vunpack.c.l.b16 %v37
  %v156 = vunpack.c.l.b16 %v38
  %v157 = vunpack.c.l.b16 %v39
  %v158 = vunpack.c.l.b16 %v40
  %v159 = vunpack.c.l.b16 %v41
  %v160 = vunpack.c.l.b16 %v42
  %v161 = vunpack.c.l.b16 %v43
  %v162 = vunpack.c.l.b16 %v44
  %v163 = vunpack.c.l.b16 %v45
  %v164 = vunpack.c.l.b16 %v46
  %v165 = vunpack.c.l.b16 %v47
  %v166 = vunpack.c.l.b16 %v48
  %v167 = vunpack.c.l.b16 %v49
  %v168 = vunpack.c.l.b16 %v50
  %v169 = vunpack.c.l.b16 %v51
  %v170 = vunpack.c.l.b16 %v52
  %v171 = vunpack.c.l.b16 %v53
  %v172 = vunpack.c.l.b16 %v54
  %v173 = vunpack.c.l.b16 %v55
  %v174 = vpack.c.b16 %v143, %v142
  %v175 = vpack.c.b16 %v145, %v144
  %v176 = vpack.c.b16 %v147, %v146
  %v177 = vpack.c.b16 %v149, %v148
  %v178 = vpack.c.b16 %v151, %v150
  %v179 = vpack.c.b16 %v153, %v152
  %v180 = vpack.c.b16 %v155, %v154
  %v181 = vpack.c.b16 %v157, %v156
  %v182 = vpack.c.b16 %v159, %v158
  %v183 = vpack.c.b16 %v161, %v160
  %v184 = vpack.c.b16 %v163, %v162
  %v185 = vpack.c.b16 %v165, %v164
  %v186 = vpack.c.b16 %v167, %v166
  %v187 = vpack.c.b16 %v169, %v168
  %v188 = vpack.c.b16 %v171, %v170
  %v189 = vpack.c.b16 %v173, %v172
  %206 = vmatprep.subr.bf16.mxu0 0
  %207 = vmatpush1.bf16.msra.mxu0 %v174
  %208 = vmatprep.subr.bf16.mxu0 0
  %209 = vmatpush1.bf16.msra.mxu0 %v175
  %210 = vmatprep.subr.bf16.mxu0 0
  %211 = vmatpush1.bf16.msra.mxu0 %v176
  %212 = vmatprep.subr.bf16.mxu0 0
  %213 = vmatpush1.bf16.msra.mxu0 %v177
  %214 = vmatprep.subr.bf16.mxu0 0
  %215 = vmatpush1.bf16.msra.mxu0 %v178
  %216 = vmatprep.subr.bf16.mxu0 0
  %217 = vmatpush1.bf16.msra.mxu0 %v179
  %218 = vmatprep.subr.bf16.mxu0 0
  %219 = vmatpush1.bf16.msra.mxu0 %v180
  %220 = vmatprep.subr.bf16.mxu0 0
  %221 = vmatpush1.bf16.msra.mxu0 %v181
  %222 = vmatprep.subr.bf16.mxu0 0
  %223 = vmatpush1.bf16.msra.mxu0 %v182
  %224 = vmatprep.subr.bf16.mxu0 0
  %225 = vmatpush1.bf16.msra.mxu0 %v183
  %226 = vmatprep.subr.bf16.mxu0 0
  %227 = vmatpush1.bf16.msra.mxu0 %v184
  %228 = vmatprep.subr.bf16.mxu0 0
  %229 = vmatpush1.bf16.msra.mxu0 %v185
  %230 = vmatprep.subr.bf16.mxu0 0
  %231 = vmatpush1.bf16.msra.mxu0 %v186
  %232 = vmatprep.subr.bf16.mxu0 0
  %233 = vmatpush1.bf16.msra.mxu0 %v187
  %234 = vmatprep.subr.bf16.mxu0 0
  %235 = vmatpush1.bf16.msra.mxu0 %v188
  %236 = vmatprep.subr.bf16.mxu0 0
  %237 = vmatpush1.bf16.msra.mxu0 %v189
  %238 = vmatprep.mubr.bf16.mxu0 %v91
  %239 = vmatmul.mubr.bf16.gmra.mrb[0].mxu0 %v90
  %v240 = vpop.f32.mrb[0].mxu0
  %v241 = vadd.f32 %v61, %v240
  %v242 = vpop.f32.mrb[0].mxu0
  %v243 = vpop.f32.mrb[0].mxu0
  %v244 = vadd.f32 %v61, %v243
  %v245 = vpop.f32.mrb[0].mxu0
  %246 = vmatprep.mubr.bf16.mxu0 %v93
  %247 = vmatmul.mubr.bf16.gmra.mrb[0].mxu0 %v92
  %v248 = vpop.f32.mrb[0].mxu0
  %v249 = vadd.f32 %v61, %v248
  %v250 = vpop.f32.mrb[0].mxu0
  %v251 = vpop.f32.mrb[0].mxu0
  %v252 = vadd.f32 %v61, %v251
  %v253 = vpop.f32.mrb[0].mxu0
  %254 = vmatprep.mubr.bf16.mxu0 %v95
  %255 = vmatmul.mubr.bf16.gmra.mrb[0].mxu0 %v94
  %v256 = vpop.f32.mrb[0].mxu0
  %v257 = vadd.f32 %v61, %v256
  %v258 = vpop.f32.mrb[0].mxu0
  %v259 = vpop.f32.mrb[0].mxu0
  %v260 = vadd.f32 %v61, %v259
  %v261 = vpop.f32.mrb[0].mxu0
  %262 = vmatprep.mubr.bf16.mxu0 %v97
  %263 = vmatmul.mubr.bf16.gmra.mrb[0].mxu0 %v96
  %v264 = vpop.f32.mrb[0].mxu0
  %v265 = vadd.f32 %v61, %v264
  %v266 = vpop.f32.mrb[0].mxu0
  %v267 = vpop.f32.mrb[0].mxu0
  %v268 = vadd.f32 %v61, %v267
  %v269 = vpop.f32.mrb[0].mxu0
  %270 = vmatprep.mubr.bf16.mxu0 %v99
  %271 = vmatmul.mubr.bf16.gmra.mrb[0].mxu0 %v98
  %v272 = vpop.f32.mrb[0].mxu0
  %v273 = vadd.f32 %v61, %v272
  %v274 = vpop.f32.mrb[0].mxu0
  %v275 = vpop.f32.mrb[0].mxu0
  %v276 = vpop.f32.mrb[0].mxu0
  %277 = vdwg.mxu0
  %v278 = vmax.f32 %v241, 0.0
  %v279 = vmax.f32 %v244, 0.0
  %v280 = vmax.f32 %v249, 0.0
  %v281 = vmax.f32 %v252, 0.0
  %v282 = vmax.f32 %v257, 0.0
  %v283 = vmax.f32 %v260, 0.0
  %v284 = vmax.f32 %v265, 0.0
  %v285 = vmax.f32 %v268, 0.0
  %v286 = vmax.f32 %v273, 0.0
  %v287 = vpack.c.bf16 %v279, %v278
  %v288 = vpack.c.bf16 %v281, %v280
  %v289 = vpack.c.bf16 %v283, %v282
  %v290 = vpack.c.bf16 %v285, %v284
  %v291 = vpack.c.bf16 %v286, %v286
  %v297 = vunpack.c.l.b16 %v287
  %v298 = vunpack.c.h.b16 %v287
  %v299 = vunpack.c.l.b16 %v288
  %v300 = vunpack.c.h.b16 %v288
  %v301 = vunpack.c.l.b16 %v289
  %v302 = vunpack.c.h.b16 %v289
  %v303 = vunpack.c.l.b16 %v290
  %v304 = vunpack.c.h.b16 %v290
  %v305 = vunpack.c.l.b16 %v291
  %v306 = vpack.c.b16 %v297, %v297
  %v307 = vpack.c.b16 %v298, %v298
  %v308 = vpack.c.b16 %v299, %v299
  %v309 = vpack.c.b16 %v300, %v300
  %v310 = vpack.c.b16 %v301, %v301
  %v311 = vpack.c.b16 %v302, %v302
  %v312 = vpack.c.b16 %v303, %v303
  %v313 = vpack.c.b16 %v304, %v304
  %v314 = vpack.c.b16 %v305, %v305
  %324 = vst [vmem:[%s3] sm:$0xf] %v306
  %325 = vst [vmem:[%s3 + $0x4] sm:$0xf] %v307
  %326 = vst [vmem:[%s3 + $0x8] sm:$0xf] %v308
  %327 = vst [vmem:[%s3 + $0xc] sm:$0xf] %v309
  %328 = vst [vmem:[%s3 + $0x10] sm:$0xf] %v310
  %329 = vst [vmem:[%s3 + $0x14] sm:$0xf] %v311
  %330 = vst [vmem:[%s3 + $0x18] sm:$0xf] %v312
  %331 = vst [vmem:[%s3 + $0x1c] sm:$0xf] %v313
  %332 = vst [vmem:[%s3 + $0x20] sm:$0xf] %v314
  // Predicated region
  $region14: #{dqn_forward.5} parent=0 // pred_check
    _
  $region15: #{dqn_forward.5} parent=0 // pred_check_branch
    %334 = sbr.rel (0) target = $region17
  $region16: #{dqn_forward.5} parent=0 // pred_region
    _
  $region17: #{dqn_forward.5} parent=0 // pred_fallthru
    _
  // Predicated region
  $region18: #{dqn_forward.5} parent=0 // pred_check
    _
  $region19: #{dqn_forward.5} parent=0 // pred_check_branch
    %336 = sbr.rel (0) target = $region21
  $region20: #{dqn_forward.5} parent=0 // pred_region
    _
  $region21: #{dqn_forward.5} parent=0 // pred_fallthru
    _

// kernel: dqn_forward.6
$region0: #{dqn_forward.6}
  #allocation0 [shape = 'u32[]', space=smem, size = 0x4, offset = 0x4, fixed_abs, tag = 'smem constant byte address 0x4 - core index']
  #allocation1 [shape = 'u32[144,128]{1,0:T(1,128)}', space=vmem, size = 0x12000, scoped, tag = 'internal scratch']
  %s0 = inlined_call_operand.vmem [shape: bf16[32,288], index: 0, kind: input, shape index: {}]
  %s1 = inlined_call_operand.vmem [shape: bf16[288,128], index: 1, kind: input, shape index: {}]
  %s2 = inlined_call_operand.vmem [shape: f32[1,128], index: 2, kind: input, shape index: {}]
  %s3 = inlined_call_operand.vmem [shape: bf16[32,128], index: 3, kind: output, shape index: {}]
  %s4 = sld [smem:[#allocation0]]
  $region22: #{dqn_forward.6} parent=0
    _
  %s6 = ssub.s32 1, %s4
  %s7 = scalar_select 0, %s6, %s4
  // Predicated region
  $region2: #{dqn_forward.6} parent=0 // pred_check
    _
  $region3: #{dqn_forward.6} parent=0 // pred_check_branch
    %9 = sbr.rel (0) target = $region5
  $region4: #{dqn_forward.6} parent=0 // pred_region
    _
  $region5: #{dqn_forward.6} parent=0 // pred_fallthru
    _
  // Predicated region
  $region6: #{dqn_forward.6} parent=0 // pred_check
    _
  $region7: #{dqn_forward.6} parent=0 // pred_check_branch
    %11 = sbr.rel (0) target = $region9
  $region8: #{dqn_forward.6} parent=0 // pred_region
    _
  $region9: #{dqn_forward.6} parent=0 // pred_fallthru
    _
  // Predicated region
  $region10: #{dqn_forward.6} parent=0 // pred_check
    _
  $region11: #{dqn_forward.6} parent=0 // pred_check_branch
    %13 = sbr.rel (0) target = $region13
  $region12: #{dqn_forward.6} parent=0 // pred_region
    _
  $region13: #{dqn_forward.6} parent=0 // pred_fallthru
    _
  %v15 = vld [vmem:[%s0] sm:$0xff]
  %v16 = vld [vmem:[%s0 + $0x8] sm:$0xf]
  %v17 = vld [vmem:[%s0 + $0xc] sm:$0xff]
  %v18 = vld [vmem:[%s0 + $0x14] sm:$0xf]
  %v19 = vld [vmem:[%s0 + $0x18] sm:$0xff]
  %v20 = vld [vmem:[%s0 + $0x20] sm:$0xf]
  %v21 = vld [vmem:[%s0 + $0x24] sm:$0xff]
  %v22 = vld [vmem:[%s0 + $0x2c] sm:$0xf]
  %v23 = vld [vmem:[%s1] sm:$0xf]
  %v24 = vld [vmem:[%s1 + $0x4] sm:$0xf]
  %v25 = vld [vmem:[%s1 + $0x8] sm:$0xf]
  %v26 = vld [vmem:[%s1 + $0xc] sm:$0xf]
  %v27 = vld [vmem:[%s1 + $0x10] sm:$0xf]
  %v28 = vld [vmem:[%s1 + $0x14] sm:$0xf]
  %v29 = vld [vmem:[%s1 + $0x18] sm:$0xf]
  %v30 = vld [vmem:[%s1 + $0x1c] sm:$0xf]
  %v31 = vld [vmem:[%s1 + $0x20] sm:$0xf]
  %v32 = vld [vmem:[%s1 + $0x24] sm:$0xf]
  %v33 = vld [vmem:[%s1 + $0x28] sm:$0xf]
  %v34 = vld [vmem:[%s1 + $0x2c] sm:$0xf]
  %v35 = vld [vmem:[%s1 + $0x30] sm:$0xf]
  %v36 = vld [vmem:[%s1 + $0x34] sm:$0xf]
  %v37 = vld [vmem:[%s1 + $0x38] sm:$0xf]
  %v38 = vld [vmem:[%s1 + $0x3c] sm:$0xf]
  %v39 = vld [vmem:[%s1 + $0x40] sm:$0xf]
  %v40 = vld [vmem:[%s1 + $0x44] sm:$0xf]
  %v41 = vld [vmem:[%s1 + $0x48] sm:$0xf]
  %v42 = vld [vmem:[%s1 + $0x4c] sm:$0xf]
  %v43 = vld [vmem:[%s1 + $0x50] sm:$0xf]
  %v44 = vld [vmem:[%s1 + $0x54] sm:$0xf]
  %v45 = vld [vmem:[%s1 + $0x58] sm:$0xf]
  %v46 = vld [vmem:[%s1 + $0x5c] sm:$0xf]
  %v47 = vld [vmem:[%s1 + $0x60] sm:$0xf]
  %v48 = vld [vmem:[%s1 + $0x64] sm:$0xf]
  %v49 = vld [vmem:[%s1 + $0x68] sm:$0xf]
  %v50 = vld [vmem:[%s1 + $0x6c] sm:$0xf]
  %v51 = vld [vmem:[%s1 + $0x70] sm:$0xf]
  %v52 = vld [vmem:[%s1 + $0x74] sm:$0xf]
  %v53 = vld [vmem:[%s1 + $0x78] sm:$0xf]
  %v54 = vld [vmem:[%s1 + $0x7c] sm:$0xf]
  %v55 = vld [vmem:[%s1 + $0x80] sm:$0xf]
  %v56 = vld [vmem:[%s1 + $0x84] sm:$0xf]
  %v57 = vld [vmem:[%s1 + $0x88] sm:$0xf]
  %v58 = vld [vmem:[%s1 + $0x8c] sm:$0xf]
  %v59 = vld [vmem:[%s2] sm:$0x1]
  %v61 = vlaneseq
  %v62 = vshrl.u32 %v61, 7
  %v63 = vsub.s32 0, %v62
  %v64 = vrot.slane %v59, %v63
  %v74 = vunpack.c.l.b16 %v15
  %v75 = vunpack.c.h.b16 %v15
  %v76 = vunpack.c.l.b16 %v16
  %v77 = vunpack.c.l.b16 %v17
  %v78 = vunpack.c.h.b16 %v17
  %v79 = vunpack.c.l.b16 %v18
  %v80 = vunpack.c.l.b16 %v19
  %v81 = vunpack.c.h.b16 %v19
  %v82 = vunpack.c.l.b16 %v20
  %v83 = vunpack.c.l.b16 %v21
  %v84 = vunpack.c.h.b16 %v21
  %v85 = vunpack.c.l.b16 %v22
  %v86 = vpack.c.b16 %v77, %v74
  %v87 = vpack.c.b16 %v78, %v75
  %v88 = vpack.c.b16 %v79, %v76
  %v89 = vpack.c.b16 %v83, %v80
  %v90 = vpack.c.b16 %v84, %v81
  %v91 = vpack.c.b16 %v85, %v82
  %v132 = vunpack.c.l.b16 %v23
  %v133 = vunpack.c.l.b16 %v24
  %v134 = vunpack.c.l.b16 %v25
  %v135 = vunpack.c.l.b16 %v26
  %v136 = vunpack.c.l.b16 %v27
  %v137 = vunpack.c.l.b16 %v28
  %v138 = vunpack.c.l.b16 %v29
  %v139 = vunpack.c.l.b16 %v30
  %v140 = vunpack.c.l.b16 %v31
  %v141 = vunpack.c.l.b16 %v32
  %v142 = vunpack.c.l.b16 %v33
  %v143 = vunpack.c.l.b16 %v34
  %v144 = vunpack.c.l.b16 %v35
  %v145 = vunpack.c.l.b16 %v36
  %v146 = vunpack.c.l.b16 %v37
  %v147 = vunpack.c.l.b16 %v38
  %v148 = vunpack.c.l.b16 %v39
  %v149 = vunpack.c.l.b16 %v40
  %v150 = vunpack.c.l.b16 %v41
  %v151 = vunpack.c.l.b16 %v42
  %v152 = vunpack.c.l.b16 %v43
  %v153 = vunpack.c.l.b16 %v44
  %v154 = vunpack.c.l.b16 %v45
  %v155 = vunpack.c.l.b16 %v46
  %v156 = vunpack.c.l.b16 %v47
  %v157 = vunpack.c.l.b16 %v48
  %v158 = vunpack.c.l.b16 %v49
  %v159 = vunpack.c.l.b16 %v50
  %v160 = vunpack.c.l.b16 %v51
  %v161 = vunpack.c.l.b16 %v52
  %v162 = vunpack.c.l.b16 %v53
  %v163 = vunpack.c.l.b16 %v54
  %v164 = vunpack.c.l.b16 %v55
  %v165 = vunpack.c.l.b16 %v56
  %v166 = vunpack.c.l.b16 %v57
  %v167 = vunpack.c.l.b16 %v58
  %v168 = vpack.c.b16 %v133, %v132
  %v169 = vpack.c.b16 %v135, %v134
  %v170 = vpack.c.b16 %v137, %v136
  %v171 = vpack.c.b16 %v139, %v138
  %v172 = vpack.c.b16 %v141, %v140
  %v173 = vpack.c.b16 %v143, %v142
  %v174 = vpack.c.b16 %v145, %v144
  %v175 = vpack.c.b16 %v147, %v146
  %v176 = vpack.c.b16 %v149, %v148
  %v177 = vpack.c.b16 %v151, %v150
  %v178 = vpack.c.b16 %v153, %v152
  %v179 = vpack.c.b16 %v155, %v154
  %v180 = vpack.c.b16 %v157, %v156
  %v181 = vpack.c.b16 %v159, %v158
  %v182 = vpack.c.b16 %v161, %v160
  %v183 = vpack.c.b16 %v163, %v162
  %v184 = vpack.c.b16 %v165, %v164
  %v185 = vpack.c.b16 %v167, %v166
  %vm204 = vcmask 261120
  %v206 = vsel %vm204, %v88, 0
  %v209 = vsel %vm204, %v91, 0
  %211 = vmatprep.subr.bf16.mxu0 0
  %212 = vmatpush1.bf16.msra.mxu0 %v168
  %213 = vmatprep.subr.bf16.mxu0 0
  %214 = vmatpush1.bf16.msra.mxu0 %v169
  %215 = vmatprep.subr.bf16.mxu0 0
  %216 = vmatpush1.bf16.msra.mxu0 %v170
  %217 = vmatprep.subr.bf16.mxu0 0
  %218 = vmatpush1.bf16.msra.mxu0 %v171
  %219 = vmatprep.subr.bf16.mxu0 0
  %220 = vmatpush1.bf16.msra.mxu0 %v172
  %221 = vmatprep.subr.bf16.mxu0 0
  %222 = vmatpush1.bf16.msra.mxu0 %v173
  %223 = vmatprep.subr.bf16.mxu0 0
  %224 = vmatpush1.bf16.msra.mxu0 %v174
  %225 = vmatprep.subr.bf16.mxu0 0
  %226 = vmatpush1.bf16.msra.mxu0 %v175
  %227 = vmatprep.subr.bf16.mxu0 0
  %228 = vmatpush1.bf16.msra.mxu0 %v176
  %229 = vmatprep.subr.bf16.mxu0 0
  %230 = vmatpush1.bf16.msra.mxu0 %v177
  %231 = vmatprep.subr.bf16.mxu0 0
  %232 = vmatpush1.bf16.msra.mxu0 %v178
  %233 = vmatprep.subr.bf16.mxu0 0
  %234 = vmatpush1.bf16.msra.mxu0 %v179
  %235 = vmatprep.subr.bf16.mxu0 0
  %236 = vmatpush1.bf16.msra.mxu0 %v180
  %237 = vmatprep.subr.bf16.mxu0 0
  %238 = vmatpush1.bf16.msra.mxu0 %v181
  %239 = vmatprep.subr.bf16.mxu0 0
  %240 = vmatpush1.bf16.msra.mxu0 %v182
  %241 = vmatprep.subr.bf16.mxu0 0
  %242 = vmatpush1.bf16.msra.mxu0 %v183
  %243 = vmatprep.mubr.bf16.mxu0 %v87
  %244 = vmatmul.mubr.bf16.gmra.mrb[0].mxu0 %v86
  %v245 = vpop.f32.mrb[0].mxu0
  %v246 = vadd.f32 %v64, %v245
  %v247 = vpop.f32.mrb[0].mxu0
  %v248 = vpop.f32.mrb[0].mxu0
  %v249 = vadd.f32 %v64, %v248
  %v250 = vpop.f32.mrb[0].mxu0
  %251 = vmatprep.mubr.bf16.mxu0 %v90
  %252 = vmatmul.mubr.bf16.gmra.mrb[0].mxu0 %v89
  %v253 = vpop.f32.mrb[0].mxu0
  %v254 = vadd.f32 %v64, %v253
  %v255 = vpop.f32.mrb[0].mxu0
  %v256 = vpop.f32.mrb[0].mxu0
  %v257 = vadd.f32 %v64, %v256
  %v258 = vpop.f32.mrb[0].mxu0
  %259 = vdwg.mxu0
  %260 = vmatprep.subr.bf16.mxu0 0
  %261 = vmatpush1.bf16.msra.mxu0 %v184
  %262 = vmatprep.subr.bf16.mxu0 0
  %263 = vmatpush1.bf16.msra.mxu0 %v185
  %264 = vmatprep.subr.bf16.mxu0 0
  %265 = vmatpush1.bf16.msra.mxu0 0
  %266 = vmatprep.subr.bf16.mxu0 0
  %267 = vmatpush1.bf16.msra.mxu0 0
  %268 = vmatprep.subr.bf16.mxu0 0
  %269 = vmatpush1.bf16.msra.mxu0 0
  %270 = vmatprep.subr.bf16.mxu0 0
  %271 = vmatpush1.bf16.msra.mxu0 0
  %272 = vmatprep.subr.bf16.mxu0 0
  %273 = vmatpush1.bf16.msra.mxu0 0
  %274 = vmatprep.subr.bf16.mxu0 0
  %275 = vmatpush1.bf16.msra.mxu0 0
  %276 = vmatprep.subr.bf16.mxu0 0
  %277 = vmatpush1.bf16.msra.mxu0 0
  %278 = vmatprep.subr.bf16.mxu0 0
  %279 = vmatpush1.bf16.msra.mxu0 0
  %280 = vmatprep.subr.bf16.mxu0 0
  %281 = vmatpush1.bf16.msra.mxu0 0
  %282 = vmatprep.subr.bf16.mxu0 0
  %283 = vmatpush1.bf16.msra.mxu0 0
  %284 = vmatprep.subr.bf16.mxu0 0
  %285 = vmatpush1.bf16.msra.mxu0 0
  %286 = vmatprep.subr.bf16.mxu0 0
  %287 = vmatpush1.bf16.msra.mxu0 0
  %288 = vmatprep.subr.bf16.mxu0 0
  %289 = vmatpush1.bf16.msra.mxu0 0
  %290 = vmatprep.subr.bf16.mxu0 0
  %291 = vmatpush1.bf16.msra.mxu0 0
  %292 = vmatprep.mubr.bf16.mxu0 0
  %293 = vmatmul.mubr.bf16.gmra.mrb[0].mxu0 %v206
  %v294 = vpop.f32.mrb[0].mxu0
  %v295 = vadd.f32 %v246, %v294
  %v296 = vpop.f32.mrb[0].mxu0
  %v297 = vpop.f32.mrb[0].mxu0
  %v298 = vadd.f32 %v249, %v297
  %v299 = vpop.f32.mrb[0].mxu0
  %300 = vmatprep.mubr.bf16.mxu0 0
  %301 = vmatmul.mubr.bf16.gmra.mrb[0].mxu0 %v209
  %v302 = vpop.f32.mrb[0].mxu0
  %v303 = vadd.f32 %v254, %v302
  %v304 = vpop.f32.mrb[0].mxu0
  %v305 = vpop.f32.mrb[0].mxu0
  %v306 = vadd.f32 %v257, %v305
  %v307 = vpop.f32.mrb[0].mxu0
  %308 = vdwg.mxu0
  %v309 = vmax.f32 %v295, 0.0
  %v310 = vmax.f32 %v298, 0.0
  %v311 = vmax.f32 %v303, 0.0
  %v312 = vmax.f32 %v306, 0.0
  %v313 = vpack.c.bf16 %v310, %v309
  %v314 = vpack.c.bf16 %v312, %v311
  %v317 = vunpack.c.l.b16 %v313
  %v318 = vunpack.c.h.b16 %v313
  %v319 = vunpack.c.l.b16 %v314
  %v320 = vunpack.c.h.b16 %v314
  %v321 = vpack.c.b16 %v317, %v317
  %v322 = vpack.c.b16 %v318, %v318
  %v323 = vpack.c.b16 %v319, %v319
  %v324 = vpack.c.b16 %v320, %v320
  %329 = vst [vmem:[%s3] sm:$0xf] %v321
  %330 = vst [vmem:[%s3 + $0x4] sm:$0xf] %v322
  %331 = vst [vmem:[%s3 + $0x8] sm:$0xf] %v323
  %332 = vst [vmem:[%s3 + $0xc] sm:$0xf] %v324
  // Predicated region
  $region14: #{dqn_forward.6} parent=0 // pred_check
    _
  $region15: #{dqn_forward.6} parent=0 // pred_check_branch
    %334 = sbr.rel (0) target = $region17
  $region16: #{dqn_forward.6} parent=0 // pred_region
    _
  $region17: #{dqn_forward.6} parent=0 // pred_fallthru
    _
  // Predicated region
  $region18: #{dqn_forward.6} parent=0 // pred_check
    _
  $region19: #{dqn_forward.6} parent=0 // pred_check_branch
    %336 = sbr.rel (0) target = $region21
  $region20: #{dqn_forward.6} parent=0 // pred_region
    _
  $region21: #{dqn_forward.6} parent=0 // pred_fallthru
    _

// kernel: dqn_forward.7
$region0: #{dqn_forward.7}
  #allocation0 [shape = 'u32[]', space=smem, size = 0x4, offset = 0x4, fixed_abs, tag = 'smem constant byte address 0x4 - core index']
  #allocation1 [shape = 'u32[144,128]{1,0:T(1,128)}', space=vmem, size = 0x12000, scoped, tag = 'internal scratch']
  %s0 = inlined_call_operand.vmem [shape: bf16[8,512], index: 0, kind: input, shape index: {}]
  %s1 = inlined_call_operand.vmem [shape: bf16[512,256], index: 1, kind: input, shape index: {}]
  %s2 = inlined_call_operand.vmem [shape: f32[1,256], index: 2, kind: input, shape index: {}]
  %s3 = inlined_call_operand.vmem [shape: bf16[256,128], index: 3, kind: input, shape index: {}]
  %s4 = inlined_call_operand.vmem [shape: f32[1,128], index: 4, kind: input, shape index: {}]
  %s5 = inlined_call_operand.vmem [shape: f32[8,128], index: 5, kind: output, shape index: {}]
  %s6 = sld [smem:[#allocation0]]
  $region30: #{dqn_forward.7} parent=0
    _
  %s8 = ssub.s32 1, %s6
  %s9 = scalar_select 0, %s8, %s6
  // Predicated region
  $region2: #{dqn_forward.7} parent=0 // pred_check
    _
  $region3: #{dqn_forward.7} parent=0 // pred_check_branch
    %11 = sbr.rel (0) target = $region5
  $region4: #{dqn_forward.7} parent=0 // pred_region
    _
  $region5: #{dqn_forward.7} parent=0 // pred_fallthru
    _
  // Predicated region
  $region6: #{dqn_forward.7} parent=0 // pred_check
    _
  $region7: #{dqn_forward.7} parent=0 // pred_check_branch
    %13 = sbr.rel (0) target = $region9
  $region8: #{dqn_forward.7} parent=0 // pred_region
    _
  $region9: #{dqn_forward.7} parent=0 // pred_fallthru
    _
  // Predicated region
  $region10: #{dqn_forward.7} parent=0 // pred_check
    _
  $region11: #{dqn_forward.7} parent=0 // pred_check_branch
    %15 = sbr.rel (0) target = $region13
  $region12: #{dqn_forward.7} parent=0 // pred_region
    _
  $region13: #{dqn_forward.7} parent=0 // pred_fallthru
    _
  // Predicated region
  $region14: #{dqn_forward.7} parent=0 // pred_check
    _
  $region15: #{dqn_forward.7} parent=0 // pred_check_branch
    %17 = sbr.rel (0) target = $region17
  $region16: #{dqn_forward.7} parent=0 // pred_region
    _
  $region17: #{dqn_forward.7} parent=0 // pred_fallthru
    _
  // Predicated region
  $region18: #{dqn_forward.7} parent=0 // pred_check
    _
  $region19: #{dqn_forward.7} parent=0 // pred_check_branch
    %19 = sbr.rel (0) target = $region21
  $region20: #{dqn_forward.7} parent=0 // pred_region
    _
  $region21: #{dqn_forward.7} parent=0 // pred_fallthru
    _
  %v21 = vld [vmem:[%s0] sm:$0xff]
  %v22 = vld [vmem:[%s0 + $0x8] sm:$0xff]
  %v23 = vld [vmem:[%s1] sm:$0xff]
  %v24 = vld [vmem:[%s1 + $0x8] sm:$0xff]
  %v25 = vld [vmem:[%s1 + $0x10] sm:$0xff]
  %v26 = vld [vmem:[%s1 + $0x18] sm:$0xff]
  %v27 = vld [vmem:[%s1 + $0x20] sm:$0xff]
  %v28 = vld [vmem:[%s1 + $0x28] sm:$0xff]
  %v29 = vld [vmem:[%s1 + $0x30] sm:$0xff]
  %v30 = vld [vmem:[%s1 + $0x38] sm:$0xff]
  %v31 = vld [vmem:[%s1 + $0x40] sm:$0xff]
  %v32 = vld [vmem:[%s1 + $0x48] sm:$0xff]
  %v33 = vld [vmem:[%s1 + $0x50] sm:$0xff]
  %v34 = vld [vmem:[%s1 + $0x58] sm:$0xff]
  %v35 = vld [vmem:[%s1 + $0x60] sm:$0xff]
  %v36 = vld [vmem:[%s1 + $0x68] sm:$0xff]
  %v37 = vld [vmem:[%s1 + $0x70] sm:$0xff]
  %v38 = vld [vmem:[%s1 + $0x78] sm:$0xff]
  %v39 = vld [vmem:[%s1 + $0x80] sm:$0xff]
  %v40 = vld [vmem:[%s1 + $0x88] sm:$0xff]
  %v41 = vld [vmem:[%s1 + $0x90] sm:$0xff]
  %v42 = vld [vmem:[%s1 + $0x98] sm:$0xff]
  %v43 = vld [vmem:[%s1 + $0xa0] sm:$0xff]
  %v44 = vld [vmem:[%s1 + $0xa8] sm:$0xff]
  %v45 = vld [vmem:[%s1 + $0xb0] sm:$0xff]
  %v46 = vld [vmem:[%s1 + $0xb8] sm:$0xff]
  %v47 = vld [vmem:[%s1 + $0xc0] sm:$0xff]
  %v48 = vld [vmem:[%s1 + $0xc8] sm:$0xff]
  %v49 = vld [vmem:[%s1 + $0xd0] sm:$0xff]
  %v50 = vld [vmem:[%s1 + $0xd8] sm:$0xff]
  %v51 = vld [vmem:[%s1 + $0xe0] sm:$0xff]
  %v52 = vld [vmem:[%s1 + $0xe8] sm:$0xff]
  %v53 = vld [vmem:[%s1 + $0xf0] sm:$0xff]
  %v54 = vld [vmem:[%s1 + $0xf8] sm:$0xff]
  %v55 = vld [vmem:[%s1 + $0x100] sm:$0xff]
  %v56 = vld [vmem:[%s1 + $0x108] sm:$0xff]
  %v57 = vld [vmem:[%s1 + $0x110] sm:$0xff]
  %v58 = vld [vmem:[%s1 + $0x118] sm:$0xff]
  %v59 = vld [vmem:[%s1 + $0x120] sm:$0xff]
  %v60 = vld [vmem:[%s1 + $0x128] sm:$0xff]
  %v61 = vld [vmem:[%s1 + $0x130] sm:$0xff]
  %v62 = vld [vmem:[%s1 + $0x138] sm:$0xff]
  %v63 = vld [vmem:[%s1 + $0x140] sm:$0xff]
  %v64 = vld [vmem:[%s1 + $0x148] sm:$0xff]
  %v65 = vld [vmem:[%s1 + $0x150] sm:$0xff]
  %v66 = vld [vmem:[%s1 + $0x158] sm:$0xff]
  %v67 = vld [vmem:[%s1 + $0x160] sm:$0xff]
  %v68 = vld [vmem:[%s1 + $0x168] sm:$0xff]
  %v69 = vld [vmem:[%s1 + $0x170] sm:$0xff]
  %v70 = vld [vmem:[%s1 + $0x178] sm:$0xff]
  %v71 = vld [vmem:[%s1 + $0x180] sm:$0xff]
  %v72 = vld [vmem:[%s1 + $0x188] sm:$0xff]
  %v73 = vld [vmem:[%s1 + $0x190] sm:$0xff]
  %v74 = vld [vmem:[%s1 + $0x198] sm:$0xff]
  %v75 = vld [vmem:[%s1 + $0x1a0] sm:$0xff]
  %v76 = vld [vmem:[%s1 + $0x1a8] sm:$0xff]
  %v77 = vld [vmem:[%s1 + $0x1b0] sm:$0xff]
  %v78 = vld [vmem:[%s1 + $0x1b8] sm:$0xff]
  %v79 = vld [vmem:[%s1 + $0x1c0] sm:$0xff]
  %v80 = vld [vmem:[%s1 + $0x1c8] sm:$0xff]
  %v81 = vld [vmem:[%s1 + $0x1d0] sm:$0xff]
  %v82 = vld [vmem:[%s1 + $0x1d8] sm:$0xff]
  %v83 = vld [vmem:[%s1 + $0x1e0] sm:$0xff]
  %v84 = vld [vmem:[%s1 + $0x1e8] sm:$0xff]
  %v85 = vld [vmem:[%s1 + $0x1f0] sm:$0xff]
  %v86 = vld [vmem:[%s1 + $0x1f8] sm:$0xff]
  %v87 = vld [vmem:[%s2] sm:$0x3]
  %v89 = vlaneseq
  %v90 = vshrl.u32 %v89, 7
  %v91 = vsub.s32 0, %v90
  %v92 = vrot.slane %v87, %v91
  %v93 = vlaneseq
  %v94 = vshrl.u32 %v93, 7
  %v95 = vsub.s32 1, %v94
  %v96 = vrot.slane %v87, %v95
  %v101 = vunpack.c.l.b16 %v21
  %v102 = vunpack.c.h.b16 %v21
  %v103 = vunpack.c.l.b16 %v22
  %v104 = vunpack.c.h.b16 %v22
  %v105 = vpack.c.b16 %v101, %v101
  %v106 = vpack.c.b16 %v102, %v102
  %v107 = vpack.c.b16 %v103, %v103
  %v108 = vpack.c.b16 %v104, %v104
  %v177 = vunpack.c.l.b16 %v23
  %v178 = vunpack.c.h.b16 %v23
  %v179 = vunpack.c.l.b16 %v24
  %v180 = vunpack.c.h.b16 %v24
  %v181 = vunpack.c.l.b16 %v25
  %v182 = vunpack.c.h.b16 %v25
  %v183 = vunpack.c.l.b16 %v26
  %v184 = vunpack.c.h.b16 %v26
  %v185 = vunpack.c.l.b16 %v27
  %v186 = vunpack.c.h.b16 %v27
  %v187 = vunpack.c.l.b16 %v28
  %v188 = vunpack.c.h.b16 %v28
  %v189 = vunpack.c.l.b16 %v29
  %v190 = vunpack.c.h.b16 %v29
  %v191 = vunpack.c.l.b16 %v30
  %v192 = vunpack.c.h.b16 %v30
  %v193 = vunpack.c.l.b16 %v31
  %v194 = vunpack.c.h.b16 %v31
  %v195 = vunpack.c.l.b16 %v32
  %v196 = vunpack.c.h.b16 %v32
  %v197 = vunpack.c.l.b16 %v33
  %v198 = vunpack.c.h.b16 %v33
  %v199 = vunpack.c.l.b16 %v34
  %v200 = vunpack.c.h.b16 %v34
  %v201 = vunpack.c.l.b16 %v35
  %v202 = vunpack.c.h.b16 %v35
  %v203 = vunpack.c.l.b16 %v36
  %v204 = vunpack.c.h.b16 %v36
  %v205 = vunpack.c.l.b16 %v37
  %v206 = vunpack.c.h.b16 %v37
  %v207 = vunpack.c.l.b16 %v38
  %v208 = vunpack.c.h.b16 %v38
  %v209 = vunpack.c.l.b16 %v39
  %v210 = vunpack.c.h.b16 %v39
  %v211 = vunpack.c.l.b16 %v40
  %v212 = vunpack.c.h.b16 %v40
  %v213 = vunpack.c.l.b16 %v41
  %v214 = vunpack.c.h.b16 %v41
  %v215 = vunpack.c.l.b16 %v42
  %v216 = vunpack.c.h.b16 %v42
  %v217 = vunpack.c.l.b16 %v43
  %v218 = vunpack.c.h.b16 %v43
  %v219 = vunpack.c.l.b16 %v44
  %v220 = vunpack.c.h.b16 %v44
  %v221 = vunpack.c.l.b16 %v45
  %v222 = vunpack.c.h.b16 %v45
  %v223 = vunpack.c.l.b16 %v46
  %v224 = vunpack.c.h.b16 %v46
  %v225 = vunpack.c.l.b16 %v47
  %v226 = vunpack.c.h.b16 %v47
  %v227 = vunpack.c.l.b16 %v48
  %v228 = vunpack.c.h.b16 %v48
  %v229 = vunpack.c.l.b16 %v49
  %v230 = vunpack.c.h.b16 %v49
  %v231 = vunpack.c.l.b16 %v50
  %v232 = vunpack.c.h.b16 %v50
  %v233 = vunpack.c.l.b16 %v51
  %v234 = vunpack.c.h.b16 %v51
  %v235 = vunpack.c.l.b16 %v52
  %v236 = vunpack.c.h.b16 %v52
  %v237 = vunpack.c.l.b16 %v53
  %v238 = vunpack.c.h.b16 %v53
  %v239 = vunpack.c.l.b16 %v54
  %v240 = vunpack.c.h.b16 %v54
  %v241 = vunpack.c.l.b16 %v55
  %v242 = vunpack.c.h.b16 %v55
  %v243 = vunpack.c.l.b16 %v56
  %v244 = vunpack.c.h.b16 %v56
  %v245 = vunpack.c.l.b16 %v57
  %v246 = vunpack.c.h.b16 %v57
  %v247 = vunpack.c.l.b16 %v58
  %v248 = vunpack.c.h.b16 %v58
  %v249 = vunpack.c.l.b16 %v59
  %v250 = vunpack.c.h.b16 %v59
  %v251 = vunpack.c.l.b16 %v60
  %v252 = vunpack.c.h.b16 %v60
  %v253 = vunpack.c.l.b16 %v61
  %v254 = vunpack.c.h.b16 %v61
  %v255 = vunpack.c.l.b16 %v62
  %v256 = vunpack.c.h.b16 %v62
  %v257 = vunpack.c.l.b16 %v63
  %v258 = vunpack.c.h.b16 %v63
  %v259 = vunpack.c.l.b16 %v64
  %v260 = vunpack.c.h.b16 %v64
  %v261 = vunpack.c.l.b16 %v65
  %v262 = vunpack.c.h.b16 %v65
  %v263 = vunpack.c.l.b16 %v66
  %v264 = vunpack.c.h.b16 %v66
  %v265 = vunpack.c.l.b16 %v67
  %v266 = vunpack.c.h.b16 %v67
  %v267 = vunpack.c.l.b16 %v68
  %v268 = vunpack.c.h.b16 %v68
  %v269 = vunpack.c.l.b16 %v69
  %v270 = vunpack.c.h.b16 %v69
  %v271 = vunpack.c.l.b16 %v70
  %v272 = vunpack.c.h.b16 %v70
  %v273 = vunpack.c.l.b16 %v71
  %v274 = vunpack.c.h.b16 %v71
  %v275 = vunpack.c.l.b16 %v72
  %v276 = vunpack.c.h.b16 %v72
  %v277 = vunpack.c.l.b16 %v73
  %v278 = vunpack.c.h.b16 %v73
  %v279 = vunpack.c.l.b16 %v74
  %v280 = vunpack.c.h.b16 %v74
  %v281 = vunpack.c.l.b16 %v75
  %v282 = vunpack.c.h.b16 %v75
  %v283 = vunpack.c.l.b16 %v76
  %v284 = vunpack.c.h.b16 %v76
  %v285 = vunpack.c.l.b16 %v77
  %v286 = vunpack.c.h.b16 %v77
  %v287 = vunpack.c.l.b16 %v78
  %v288 = vunpack.c.h.b16 %v78
  %v289 = vunpack.c.l.b16 %v79
  %v290 = vunpack.c.h.b16 %v79
  %v291 = vunpack.c.l.b16 %v80
  %v292 = vunpack.c.h.b16 %v80
  %v293 = vunpack.c.l.b16 %v81
  %v294 = vunpack.c.h.b16 %v81
  %v295 = vunpack.c.l.b16 %v82
  %v296 = vunpack.c.h.b16 %v82
  %v297 = vunpack.c.l.b16 %v83
  %v298 = vunpack.c.h.b16 %v83
  %v299 = vunpack.c.l.b16 %v84
  %v300 = vunpack.c.h.b16 %v84
  %v301 = vunpack.c.l.b16 %v85
  %v302 = vunpack.c.h.b16 %v85
  %v303 = vunpack.c.l.b16 %v86
  %v304 = vunpack.c.h.b16 %v86
  %v305 = vpack.c.b16 %v179, %v177
  %v306 = vpack.c.b16 %v180, %v178
  %v307 = vpack.c.b16 %v183, %v181
  %v308 = vpack.c.b16 %v184, %v182
  %v309 = vpack.c.b16 %v187, %v185
  %v310 = vpack.c.b16 %v188, %v186
  %v311 = vpack.c.b16 %v191, %v189
  %v312 = vpack.c.b16 %v192, %v190
  %v313 = vpack.c.b16 %v195, %v193
  %v314 = vpack.c.b16 %v196, %v194
  %v315 = vpack.c.b16 %v199, %v197
  %v316 = vpack.c.b16 %v200, %v198
  %v317 = vpack.c.b16 %v203, %v201
  %v318 = vpack.c.b16 %v204, %v202
  %v319 = vpack.c.b16 %v207, %v205
  %v320 = vpack.c.b16 %v208, %v206
  %v321 = vpack.c.b16 %v211, %v209
  %v322 = vpack.c.b16 %v212, %v210
  %v323 = vpack.c.b16 %v215, %v213
  %v324 = vpack.c.b16 %v216, %v214
  %v325 = vpack.c.b16 %v219, %v217
  %v326 = vpack.c.b16 %v220, %v218
  %v327 = vpack.c.b16 %v223, %v221
  %v328 = vpack.c.b16 %v224, %v222
  %v329 = vpack.c.b16 %v227, %v225
  %v330 = vpack.c.b16 %v228, %v226
  %v331 = vpack.c.b16 %v231, %v229
  %v332 = vpack.c.b16 %v232, %v230
  %v333 = vpack.c.b16 %v235, %v233
  %v334 = vpack.c.b16 %v236, %v234
  %v335 = vpack.c.b16 %v239, %v237
  %v336 = vpack.c.b16 %v240, %v238
  %v337 = vpack.c.b16 %v243, %v241
  %v338 = vpack.c.b16 %v244, %v242
  %v339 = vpack.c.b16 %v247, %v245
  %v340 = vpack.c.b16 %v248, %v246
  %v341 = vpack.c.b16 %v251, %v249
  %v342 = vpack.c.b16 %v252, %v250
  %v343 = vpack.c.b16 %v255, %v253
  %v344 = vpack.c.b16 %v256, %v254
  %v345 = vpack.c.b16 %v259, %v257
  %v346 = vpack.c.b16 %v260, %v258
  %v347 = vpack.c.b16 %v263, %v261
  %v348 = vpack.c.b16 %v264, %v262
  %v349 = vpack.c.b16 %v267, %v265
  %v350 = vpack.c.b16 %v268, %v266
  %v351 = vpack.c.b16 %v271, %v269
  %v352 = vpack.c.b16 %v272, %v270
  %v353 = vpack.c.b16 %v275, %v273
  %v354 = vpack.c.b16 %v276, %v274
  %v355 = vpack.c.b16 %v279, %v277
  %v356 = vpack.c.b16 %v280, %v278
  %v357 = vpack.c.b16 %v283, %v281
  %v358 = vpack.c.b16 %v284, %v282
  %v359 = vpack.c.b16 %v287, %v285
  %v360 = vpack.c.b16 %v288, %v286
  %v361 = vpack.c.b16 %v291, %v289
  %v362 = vpack.c.b16 %v292, %v290
  %v363 = vpack.c.b16 %v295, %v293
  %v364 = vpack.c.b16 %v296, %v294
  %v365 = vpack.c.b16 %v299, %v297
  %v366 = vpack.c.b16 %v300, %v298
  %v367 = vpack.c.b16 %v303, %v301
  %v368 = vpack.c.b16 %v304, %v302
  %433 = vmatprep.subr.bf16.mxu0 %v306
  %434 = vmatpush1.bf16.msra.mxu0 %v305
  %435 = vmatprep.subr.bf16.mxu0 %v308
  %436 = vmatpush1.bf16.msra.mxu0 %v307
  %437 = vmatprep.subr.bf16.mxu0 %v310
  %438 = vmatpush1.bf16.msra.mxu0 %v309
  %439 = vmatprep.subr.bf16.mxu0 %v312
  %440 = vmatpush1.bf16.msra.mxu0 %v311
  %441 = vmatprep.subr.bf16.mxu0 %v314
  %442 = vmatpush1.bf16.msra.mxu0 %v313
  %443 = vmatprep.subr.bf16.mxu0 %v316
  %444 = vmatpush1.bf16.msra.mxu0 %v315
  %445 = vmatprep.subr.bf16.mxu0 %v318
  %446 = vmatpush1.bf16.msra.mxu0 %v317
  %447 = vmatprep.subr.bf16.mxu0 %v320
  %448 = vmatpush1.bf16.msra.mxu0 %v319
  %449 = vmatprep.subr.bf16.mxu0 %v322
  %450 = vmatpush1.bf16.msra.mxu0 %v321
  %451 = vmatprep.subr.bf16.mxu0 %v324
  %452 = vmatpush1.bf16.msra.mxu0 %v323
  %453 = vmatprep.subr.bf16.mxu0 %v326
  %454 = vmatpush1.bf16.msra.mxu0 %v325
  %455 = vmatprep.subr.bf16.mxu0 %v328
  %456 = vmatpush1.bf16.msra.mxu0 %v327
  %457 = vmatprep.subr.bf16.mxu0 %v330
  %458 = vmatpush1.bf16.msra.mxu0 %v329
  %459 = vmatprep.subr.bf16.mxu0 %v332
  %460 = vmatpush1.bf16.msra.mxu0 %v331
  %461 = vmatprep.subr.bf16.mxu0 %v334
  %462 = vmatpush1.bf16.msra.mxu0 %v333
  %463 = vmatprep.subr.bf16.mxu0 %v336
  %464 = vmatpush1.bf16.msra.mxu0 %v335
  %465 = vmatprep.mubr.bf16.mxu0 %v106
  %466 = vmatmul.mubr.bf16.gmra.mrb[0].mxu0 %v105
  %v467 = vpop.f32.mrb[0].mxu0
  %v468 = vadd.f32 %v92, %v467
  %v469 = vpop.f32.mrb[0].mxu0
  %v470 = vadd.f32 %v96, %v469
  %v471 = vpop.f32.mrb[0].mxu0
  %v472 = vpop.f32.mrb[0].mxu0
  %473 = vdwg.mxu0
  %474 = vmatprep.subr.bf16.mxu0 %v338
  %475 = vmatpush1.bf16.msra.mxu0 %v337
  %476 = vmatprep.subr.bf16.mxu0 %v340
  %477 = vmatpush1.bf16.msra.mxu0 %v339
  %478 = vmatprep.subr.bf16.mxu0 %v342
  %479 = vmatpush1.bf16.msra.mxu0 %v341
  %480 = vmatprep.subr.bf16.mxu0 %v344
  %481 = vmatpush1.bf16.msra.mxu0 %v343
  %482 = vmatprep.subr.bf16.mxu0 %v346
  %483 = vmatpush1.bf16.msra.mxu0 %v345
  %484 = vmatprep.subr.bf16.mxu0 %v348
  %485 = vmatpush1.bf16.msra.mxu0 %v347
  %486 = vmatprep.subr.bf16.mxu0 %v350
  %487 = vmatpush1.bf16.msra.mxu0 %v349
  %488 = vmatprep.subr.bf16.mxu0 %v352
  %489 = vmatpush1.bf16.msra.mxu0 %v351
  %490 = vmatprep.subr.bf16.mxu0 %v354
  %491 = vmatpush1.bf16.msra.mxu0 %v353
  %492 = vmatprep.subr.bf16.mxu0 %v356
  %493 = vmatpush1.bf16.msra.mxu0 %v355
  %494 = vmatprep.subr.bf16.mxu0 %v358
  %495 = vmatpush1.bf16.msra.mxu0 %v357
  %496 = vmatprep.subr.bf16.mxu0 %v360
  %497 = vmatpush1.bf16.msra.mxu0 %v359
  %498 = vmatprep.subr.bf16.mxu0 %v362
  %499 = vmatpush1.bf16.msra.mxu0 %v361
  %500 = vmatprep.subr.bf16.mxu0 %v364
  %501 = vmatpush1.bf16.msra.mxu0 %v363
  %502 = vmatprep.subr.bf16.mxu0 %v366
  %503 = vmatpush1.bf16.msra.mxu0 %v365
  %504 = vmatprep.subr.bf16.mxu0 %v368
  %505 = vmatpush1.bf16.msra.mxu0 %v367
  %506 = vmatprep.mubr.bf16.mxu0 %v108
  %507 = vmatmul.mubr.bf16.gmra.mrb[0].mxu0 %v107
  %v508 = vpop.f32.mrb[0].mxu0
  %v509 = vadd.f32 %v468, %v508
  %v510 = vpop.f32.mrb[0].mxu0
  %v511 = vadd.f32 %v470, %v510
  %v512 = vpop.f32.mrb[0].mxu0
  %v513 = vpop.f32.mrb[0].mxu0
  %514 = vdwg.mxu0
  %v515 = vmax.f32 %v509, 0.0
  %v516 = vmax.f32 %v511, 0.0
  %v517 = vpack.c.bf16 %v515, %v515
  %v518 = vpack.c.bf16 %v516, %v516
  %v519 = vld [vmem:[%s3] sm:$0xf]
  %v520 = vld [vmem:[%s3 + $0x4] sm:$0xf]
  %v521 = vld [vmem:[%s3 + $0x8] sm:$0xf]
  %v522 = vld [vmem:[%s3 + $0xc] sm:$0xf]
  %v523 = vld [vmem:[%s3 + $0x10] sm:$0xf]
  %v524 = vld [vmem:[%s3 + $0x14] sm:$0xf]
  %v525 = vld [vmem:[%s3 + $0x18] sm:$0xf]
  %v526 = vld [vmem:[%s3 + $0x1c] sm:$0xf]
  %v527 = vld [vmem:[%s3 + $0x20] sm:$0xf]
  %v528 = vld [vmem:[%s3 + $0x24] sm:$0xf]
  %v529 = vld [vmem:[%s3 + $0x28] sm:$0xf]
  %v530 = vld [vmem:[%s3 + $0x2c] sm:$0xf]
  %v531 = vld [vmem:[%s3 + $0x30] sm:$0xf]
  %v532 = vld [vmem:[%s3 + $0x34] sm:$0xf]
  %v533 = vld [vmem:[%s3 + $0x38] sm:$0xf]
  %v534 = vld [vmem:[%s3 + $0x3c] sm:$0xf]
  %v535 = vld [vmem:[%s3 + $0x40] sm:$0xf]
  %v536 = vld [vmem:[%s3 + $0x44] sm:$0xf]
  %v537 = vld [vmem:[%s3 + $0x48] sm:$0xf]
  %v538 = vld [vmem:[%s3 + $0x4c] sm:$0xf]
  %v539 = vld [vmem:[%s3 + $0x50] sm:$0xf]
  %v540 = vld [vmem:[%s3 + $0x54] sm:$0xf]
  %v541 = vld [vmem:[%s3 + $0x58] sm:$0xf]
  %v542 = vld [vmem:[%s3 + $0x5c] sm:$0xf]
  %v543 = vld [vmem:[%s3 + $0x60] sm:$0xf]
  %v544 = vld [vmem:[%s3 + $0x64] sm:$0xf]
  %v545 = vld [vmem:[%s3 + $0x68] sm:$0xf]
  %v546 = vld [vmem:[%s3 + $0x6c] sm:$0xf]
  %v547 = vld [vmem:[%s3 + $0x70] sm:$0xf]
  %v548 = vld [vmem:[%s3 + $0x74] sm:$0xf]
  %v549 = vld [vmem:[%s3 + $0x78] sm:$0xf]
  %v550 = vld [vmem:[%s3 + $0x7c] sm:$0xf]
  %v551 = vld [vmem:[%s4] sm:$0x1]
  %v553 = vlaneseq
  %v554 = vshrl.u32 %v553, 7
  %v555 = vsub.s32 0, %v554
  %v556 = vrot.slane %v551, %v555
  %v590 = vunpack.c.l.b16 %v519
  %v591 = vunpack.c.l.b16 %v520
  %v592 = vunpack.c.l.b16 %v521
  %v593 = vunpack.c.l.b16 %v522
  %v594 = vunpack.c.l.b16 %v523
  %v595 = vunpack.c.l.b16 %v524
  %v596 = vunpack.c.l.b16 %v525
  %v597 = vunpack.c.l.b16 %v526
  %v598 = vunpack.c.l.b16 %v527
  %v599 = vunpack.c.l.b16 %v528
  %v600 = vunpack.c.l.b16 %v529
  %v601 = vunpack.c.l.b16 %v530
  %v602 = vunpack.c.l.b16 %v531
  %v603 = vunpack.c.l.b16 %v532
  %v604 = vunpack.c.l.b16 %v533
  %v605 = vunpack.c.l.b16 %v534
  %v606 = vunpack.c.l.b16 %v535
  %v607 = vunpack.c.l.b16 %v536
  %v608 = vunpack.c.l.b16 %v537
  %v609 = vunpack.c.l.b16 %v538
  %v610 = vunpack.c.l.b16 %v539
  %v611 = vunpack.c.l.b16 %v540
  %v612 = vunpack.c.l.b16 %v541
  %v613 = vunpack.c.l.b16 %v542
  %v614 = vunpack.c.l.b16 %v543
  %v615 = vunpack.c.l.b16 %v544
  %v616 = vunpack.c.l.b16 %v545
  %v617 = vunpack.c.l.b16 %v546
  %v618 = vunpack.c.l.b16 %v547
  %v619 = vunpack.c.l.b16 %v548
  %v620 = vunpack.c.l.b16 %v549
  %v621 = vunpack.c.l.b16 %v550
  %v622 = vpack.c.b16 %v591, %v590
  %v623 = vpack.c.b16 %v593, %v592
  %v624 = vpack.c.b16 %v595, %v594
  %v625 = vpack.c.b16 %v597, %v596
  %v626 = vpack.c.b16 %v599, %v598
  %v627 = vpack.c.b16 %v601, %v600
  %v628 = vpack.c.b16 %v603, %v602
  %v629 = vpack.c.b16 %v605, %v604
  %v630 = vpack.c.b16 %v607, %v606
  %v631 = vpack.c.b16 %v609, %v608
  %v632 = vpack.c.b16 %v611, %v610
  %v633 = vpack.c.b16 %v613, %v612
  %v634 = vpack.c.b16 %v615, %v614
  %v635 = vpack.c.b16 %v617, %v616
  %v636 = vpack.c.b16 %v619, %v618
  %v637 = vpack.c.b16 %v621, %v620
  %654 = vmatprep.subr.bf16.mxu0 0
  %655 = vmatpush1.bf16.msra.mxu0 %v622
  %656 = vmatprep.subr.bf16.mxu0 0
  %657 = vmatpush1.bf16.msra.mxu0 %v623
  %658 = vmatprep.subr.bf16.mxu0 0
  %659 = vmatpush1.bf16.msra.mxu0 %v624
  %660 = vmatprep.subr.bf16.mxu0 0
  %661 = vmatpush1.bf16.msra.mxu0 %v625
  %662 = vmatprep.subr.bf16.mxu0 0
  %663 = vmatpush1.bf16.msra.mxu0 %v626
  %664 = vmatprep.subr.bf16.mxu0 0
  %665 = vmatpush1.bf16.msra.mxu0 %v627
  %666 = vmatprep.subr.bf16.mxu0 0
  %667 = vmatpush1.bf16.msra.mxu0 %v628
  %668 = vmatprep.subr.bf16.mxu0 0
  %669 = vmatpush1.bf16.msra.mxu0 %v629
  %670 = vmatprep.subr.bf16.mxu0 0
  %671 = vmatpush1.bf16.msra.mxu0 %v630
  %672 = vmatprep.subr.bf16.mxu0 0
  %673 = vmatpush1.bf16.msra.mxu0 %v631
  %674 = vmatprep.subr.bf16.mxu0 0
  %675 = vmatpush1.bf16.msra.mxu0 %v632
  %676 = vmatprep.subr.bf16.mxu0 0
  %677 = vmatpush1.bf16.msra.mxu0 %v633
  %678 = vmatprep.subr.bf16.mxu0 0
  %679 = vmatpush1.bf16.msra.mxu0 %v634
  %680 = vmatprep.subr.bf16.mxu0 0
  %681 = vmatpush1.bf16.msra.mxu0 %v635
  %682 = vmatprep.subr.bf16.mxu0 0
  %683 = vmatpush1.bf16.msra.mxu0 %v636
  %684 = vmatprep.subr.bf16.mxu0 0
  %685 = vmatpush1.bf16.msra.mxu0 %v637
  %686 = vmatprep.mubr.bf16.mxu0 %v518
  %687 = vmatmul.mubr.bf16.gmra.mrb[0].mxu0 %v517
  %v688 = vpop.f32.mrb[0].mxu0
  %v689 = vadd.f32 %v556, %v688
  %v690 = vpop.f32.mrb[0].mxu0
  %v691 = vpop.f32.mrb[0].mxu0
  %v692 = vpop.f32.mrb[0].mxu0
  %693 = vdwg.mxu0
  %694 = vst [vmem:[%s5] sm:$0xff] %v689
  // Predicated region
  $region22: #{dqn_forward.7} parent=0 // pred_check
    _
  $region23: #{dqn_forward.7} parent=0 // pred_check_branch
    %696 = sbr.rel (0) target = $region25
  $region24: #{dqn_forward.7} parent=0 // pred_region
    _
  $region25: #{dqn_forward.7} parent=0 // pred_fallthru
    _
  // Predicated region
  $region26: #{dqn_forward.7} parent=0 // pred_check
    _
  $region27: #{dqn_forward.7} parent=0 // pred_check_branch
    %698 = sbr.rel (0) target = $region29
  $region28: #{dqn_forward.7} parent=0 // pred_region
    _
  $region29: #{dqn_forward.7} parent=0 // pred_fallthru
    _

</llo_original>
